<compile_context>
chip_gen: v7x
topology: tpu7x:2x2x1
jax: 0.10.0
libtpu: 0.0.40
codegen_flags: <defaults>
</compile_context>

<pallas_src>
import functools

import numpy as np
import jax
import jax.numpy as jnp
from jax import lax
from jax.experimental import pallas as pl
from jax.experimental.pallas import tpu as pltpu

# torchvision vgg16 "D" configuration of model.features
VGG16_CFG = [64, 64, 'M', 128, 128, 'M', 256, 256, 256, 'M',
             512, 512, 512, 'M', 512, 512, 512, 'M']


# --------------------------------------------------------------------------
# helpers
# --------------------------------------------------------------------------
def _pick_tile(total, candidates):
    for c in candidates:
        if c <= total and total % c == 0:
            return c
    return total


def _pick_row_tile(H, W, Cin, Cout, pool):
    """Largest row-stripe TH dividing H (even if pooling) with <=2MB stripe/acc."""
    best = 2 if pool else 1
    limit = 2 * 1024 * 1024
    for t in range(1, H + 1):
        if H % t:
            continue
        if pool and t % 2:
            continue
        stripe_bytes = (t + 2) * (W + 2) * Cin * 2          # bf16 input stripe
        acc_bytes = t * (W + 2) * Cout * 4                  # f32 accumulator
        if stripe_bytes <= limit and acc_bytes <= limit:
            best = t
    return best


# --------------------------------------------------------------------------
# Generic tiled matmul + bias (+ optional ReLU): fc layer and im2col'ed first
# conv.  K (reduction) axis is last in the grid.
# --------------------------------------------------------------------------
def _matmul_bias_kernel(x_ref, w_ref, b_ref, o_ref, acc_ref, *, relu):
    k = pl.program_id(2)

    @pl.when(k == 0)
    def _():
        acc_ref[...] = jnp.zeros_like(acc_ref)

    acc_ref[...] += jnp.dot(x_ref[...], w_ref[...],
                            preferred_element_type=jnp.float32)

    @pl.when(k == pl.num_programs(2) - 1)
    def _():
        y = acc_ref[...] + b_ref[...]          # f32 epilogue
        if relu:
            y = jnp.maximum(y, 0.0)
        o_ref[...] = y.astype(o_ref.dtype)


def matmul_bias(x, w, b, *, relu, out_dtype):
    M, K = x.shape
    _, N = w.shape
    tm = _pick_tile(M, (512, 256, 128, 64, 32, 16, 8))
    tn = _pick_tile(N, (1024, 512, 256, 128, 64))
    tk = _pick_tile(K, (3584, 2048, 1792, 1024, 512, 256, 128))
    grid = (M // tm, N // tn, K // tk)
    return pl.pallas_call(
        functools.partial(_matmul_bias_kernel, relu=relu),
        out_shape=jax.ShapeDtypeStruct((M, N), out_dtype),
        grid=grid,
        in_specs=[
            pl.BlockSpec((tm, tk), lambda i, j, k: (i, k)),
            pl.BlockSpec((tk, tn), lambda i, j, k: (k, j)),
            pl.BlockSpec((1, tn), lambda i, j, k: (0, j)),
        ],
        out_specs=pl.BlockSpec((tm, tn), lambda i, j, k: (i, j)),
        scratch_shapes=[pltpu.VMEM((tm, tn), jnp.float32)],
        compiler_params=pltpu.CompilerParams(
            dimension_semantics=("parallel", "parallel", "arbitrary"),
            vmem_limit_bytes=32 * 1024 * 1024),
    )(x, w, b.reshape(1, N))


# --------------------------------------------------------------------------
# First conv layer (Cin == 3): im2col in glue -> tiled matmul + bias + ReLU.
# --------------------------------------------------------------------------
def conv3x3_first(x, w_hwio, b):
    N, H, W, Cin = x.shape
    Cout = w_hwio.shape[-1]
    xp = jnp.pad(x, ((0, 0), (1, 1), (1, 1), (0, 0)))
    cols = [xp[:, kh:kh + H, kw:kw + W, :] for kh in range(3) for kw in range(3)]
    patches = jnp.concatenate(cols, axis=-1).reshape(N * H * W, 9 * Cin)
    y = matmul_bias(patches, w_hwio.reshape(9 * Cin, Cout), b,
                    relu=True, out_dtype=x.dtype)
    return y.reshape(N, H, W, Cout)


# --------------------------------------------------------------------------
# 3x3 conv (pad=1, stride=1) + bias + ReLU (+ optional fused 2x2 max-pool).
#
# The padded input is flattened in glue to (N, (H+2)*(W+2) + 8, Cin) so a row
# stripe (with halo) is one contiguous DMA, and every conv tap is a contiguous
# 2D slab of the scratch: tap (kh,kw) uses rows
# [kh*(W+2)+kw : kh*(W+2)+kw + TH*(W+2)), i.e. a (TH*(W+2), Cin) matmul per
# tap.  The 2 extra "columns" per row (plus 8 tail rows) are junk and never
# written out.  Pool(relu(x+b)) == relu(pool(x)+b) (monotone), so pooling is
# done on the raw accumulator and bias/ReLU are applied per output row.
# --------------------------------------------------------------------------
def _conv3x3_kernel(x_hbm, w_ref, b_ref, o_ref, xs_ref, acc_ref, *rest,
                    TH, W, pool):
    if pool:
        pool_ref, sem = rest
    else:
        (sem,) = rest

    Wp = W + 2
    n = pl.program_id(0)
    h = pl.program_id(1)
    rows = (TH + 2) * Wp + 8

    cp = pltpu.make_async_copy(x_hbm.at[n, pl.ds(h * (TH * Wp), rows)],
                               xs_ref, sem)
    cp.start()
    cp.wait()

    first = True
    for kh in range(3):
        for kw in range(3):
            lhs = xs_ref[pl.ds(kh * Wp + kw, TH * Wp), :]     # (TH*Wp, Cin) bf16
            contrib = jnp.dot(lhs, w_ref[kh, kw],
                              preferred_element_type=jnp.float32)
            if first:
                acc_ref[...] = contrib
                first = False
            else:
                acc_ref[...] += contrib

    b = b_ref[...]                                            # (1, Cout) f32
    if pool:
        Hw = Wp // 2
        # width-direction pool over the whole stripe (junk cols are dropped later)
        pool_ref[...] = jnp.maximum(acc_ref[pl.ds(0, TH * Hw, stride=2), :],
                                    acc_ref[pl.ds(1, TH * Hw, stride=2), :])
        for r in range(TH // 2):
            top = pool_ref[pl.ds((2 * r) * Hw, W // 2), :]
            bot = pool_ref[pl.ds((2 * r + 1) * Hw, W // 2), :]
            y = jnp.maximum(jnp.maximum(top, bot) + b, 0.0)
            o_ref[0, r] = y.astype(o_ref.dtype)
    else:
        for t in range(TH):
            row = acc_ref[pl.ds(t * Wp, W), :]
            y = jnp.maximum(row + b, 0.0)
            o_ref[0, t] = y.astype(o_ref.dtype)


def conv3x3_relu(x, w, b, *, pool=False):
    # x: (N, H, W, Cin) bf16 ; w: (3, 3, Cin, Cout) bf16 ; b: (Cout,) f32
    N, H, W, Cin = x.shape
    Cout = w.shape[-1]
    if pool:
        assert H % 2 == 0 and W % 2 == 0
    th = _pick_row_tile(H, W, Cin, Cout, pool)
    Wp = W + 2

    xp = jnp.pad(x, ((0, 0), (1, 1), (1, 1), (0, 0)))          # spatial zero pad
    xp2 = jnp.pad(xp.reshape(N, (H + 2) * Wp, Cin), ((0, 0), (0, 8), (0, 0)))

    Ho, Wo, tho = (H // 2, W // 2, th // 2) if pool else (H, W, th)
    kernel = functools.partial(_conv3x3_kernel, TH=th, W=W, pool=pool)

    scratch = [
        pltpu.VMEM(((th + 2) * Wp + 8, Cin), x.dtype),         # input stripe + halo
        pltpu.VMEM((th * Wp, Cout), jnp.float32),              # f32 accumulator
    ]
    if pool:
        scratch.append(pltpu.VMEM((th * (Wp // 2), Cout), jnp.float32))
    scratch.append(pltpu.SemaphoreType.DMA(()))

    return pl.pallas_call(
        kernel,
        out_shape=jax.ShapeDtypeStruct((N, Ho, Wo, Cout), x.dtype),
        grid=(N, H // th),
        in_specs=[
            pl.BlockSpec(memory_space=pl.ANY),                 # flattened padded input (HBM)
            pl.BlockSpec((3, 3, Cin, Cout), lambda n, h: (0, 0, 0, 0)),
            pl.BlockSpec((1, Cout), lambda n, h: (0, 0)),
        ],
        out_specs=pl.BlockSpec((1, tho, Wo, Cout), lambda n, h: (n, h, 0, 0)),
        scratch_shapes=scratch,
        compiler_params=pltpu.CompilerParams(
            dimension_semantics=("parallel", "parallel"),
            vmem_limit_bytes=24 * 1024 * 1024),
    )(xp2, w, b.reshape(1, Cout))


# --------------------------------------------------------------------------
# AdaptiveAvgPool2d((7, 7)) — static torch window boundaries, f32 sums.
# --------------------------------------------------------------------------
def _adaptive_avgpool7_kernel(x_ref, o_ref):
    _, Hin, Win, _ = x_ref.shape
    for i in range(7):
        h0 = (i * Hin) // 7
        h1 = -(-((i + 1) * Hin) // 7)
        for j in range(7):
            w0 = (j * Win) // 7
            w1 = -(-((j + 1) * Win) // 7)
            win = x_ref[0, h0:h1, w0:w1, :].astype(jnp.float32)
            s = jnp.sum(win, axis=1)
            s = jnp.sum(s, axis=0, keepdims=True)
            o_ref[0, i, pl.ds(j, 1)] = (
                s / float((h1 - h0) * (w1 - w0))).astype(o_ref.dtype)


def adaptive_avgpool7(x):
    N, H, W, C = x.shape
    return pl.pallas_call(
        _adaptive_avgpool7_kernel,
        out_shape=jax.ShapeDtypeStruct((N, 7, 7, C), x.dtype),
        grid=(N,),
        in_specs=[pl.BlockSpec((1, H, W, C), lambda n: (n, 0, 0, 0))],
        out_specs=pl.BlockSpec((1, 7, 7, C), lambda n: (n, 0, 0, 0)),
        compiler_params=pltpu.CompilerParams(
            dimension_semantics=("parallel",)),
    )(x)


# --------------------------------------------------------------------------
# Parameter construction (deterministic, synthetic — stands in for pretrained).
# TODO(synk): pretrained torchvision weights cannot be loaded in-script; shapes
# and forward semantics match torchvision.models.vgg16 exactly.
# --------------------------------------------------------------------------
def build_params(key):
    conv_params = []      # ('conv', w_hwio bf16, b f32) or ('M', None, None)
    cin = 3
    for v in VGG16_CFG:
        if v == 'M':
            conv_params.append(('M', None, None))
            continue
        key, kw_, kb_ = jax.random.split(key, 3)
        w_t = jax.random.normal(kw_, (v, cin, 3, 3), jnp.float32) * np.sqrt(2.0 / (cin * 9))
        b = jax.random.normal(kb_, (v,), jnp.float32) * 0.01
        w_hwio = jnp.transpose(w_t, (2, 3, 1, 0)).astype(jnp.bfloat16)   # (3,3,Cin,Cout)
        conv_params.append(('conv', w_hwio, b))
        cin = v

    key, kw_, kb_ = jax.random.split(key, 3)
    fc_w_t = jax.random.normal(kw_, (4096, 512 * 7 * 7), jnp.float32) * np.sqrt(1.0 / (512 * 7 * 7))
    fc_b = jax.random.normal(kb_, (4096,), jnp.float32) * 0.01
    # torch fc weight acts on the CHW flatten; re-order columns to the NHWC
    # flatten order and transpose to (K, Nout) for x @ W.
    fc_w = jnp.transpose(
        fc_w_t.reshape(4096, 512, 7, 7).transpose(0, 2, 3, 1).reshape(4096, 512 * 7 * 7)
    ).astype(jnp.bfloat16)
    return conv_params, fc_w, fc_b, key


# --------------------------------------------------------------------------
# Forward passes
# --------------------------------------------------------------------------
def feature_extractor_pallas(x_nchw, conv_params, fc_w, fc_b):
    out = jnp.transpose(x_nchw, (0, 2, 3, 1)).astype(jnp.bfloat16)   # NCHW -> NHWC
    i = 0
    while i < len(conv_params):                    # model.features
        kind, w, b = conv_params[i]
        assert kind == 'conv'
        fuse_pool = (i + 1 < len(conv_params) and conv_params[i + 1][0] == 'M')
        if out.shape[-1] == 3:                     # first layer: im2col matmul
            assert not fuse_pool
            out = conv3x3_first(out, w, b)
            i += 1
        else:
            out = conv3x3_relu(out, w, b, pool=fuse_pool)
            i += 2 if fuse_pool else 1
    out = adaptive_avgpool7(out)                   # model.avgpool
    out = out.reshape(out.shape[0], -1)            # nn.Flatten() (NHWC order)
    return matmul_bias(out, fc_w, fc_b, relu=False, out_dtype=jnp.float32)


def feature_extractor_reference(x_nchw, conv_params, fc_w, fc_b):
    # Pure-JAX reference mirroring the kernel's bf16 storage / f32 accumulation.
    out = jnp.transpose(x_nchw, (0, 2, 3, 1)).astype(jnp.bfloat16)
    for kind, w, b in conv_params:
        if kind == 'M':
            out = lax.reduce_window(out, jnp.array(-jnp.inf, out.dtype), lax.max,
                                    (1, 2, 2, 1), (1, 2, 2, 1), 'VALID')
        else:
            y = lax.conv_general_dilated(
                out, w, (1, 1), ((1, 1), (1, 1)),
                dimension_numbers=('NHWC', 'HWIO', 'NHWC'),
                preferred_element_type=jnp.float32)
            y = jnp.maximum(y + b.reshape(1, 1, 1, -1), 0.0)
            out = y.astype(jnp.bfloat16)
    N, H, W, _ = out.shape
    rows = []
    for i in range(7):
        h0, h1 = (i * H) // 7, -(-((i + 1) * H) // 7)
        cols = []
        for j in range(7):
            w0, w1 = (j * W) // 7, -(-((j + 1) * W) // 7)
            cols.append(jnp.mean(out[:, h0:h1, w0:w1, :].astype(jnp.float32),
                                 axis=(1, 2)))
        rows.append(jnp.stack(cols, axis=1))
    pooled = jnp.stack(rows, axis=1).astype(jnp.bfloat16)   # (N, 7, 7, C)
    flat = pooled.reshape(N, -1)
    return jnp.dot(flat, fc_w, preferred_element_type=jnp.float32) + fc_b


if __name__ == "__main__":
    key = jax.random.PRNGKey(0)
    conv_params, fc_w, fc_b, key = build_params(key)

    key, kx = jax.random.split(key)
    # PyTorch-convention input: NCHW, 3 channels.  32x32 so the 5 stride-2
    # maxpools leave 1x1 before the adaptive pool (small-shape test).
    x = jax.random.normal(kx, (2, 3, 32, 32), jnp.float32)

    out = feature_extractor_pallas(x, conv_params, fc_w, fc_b)
    out = jax.block_until_ready(out)
    assert out.shape == (2, 4096), out.shape
    assert bool(jnp.all(jnp.isfinite(out)))

    ref = jax.block_until_ready(
        feature_extractor_reference(x, conv_params, fc_w, fc_b))
    err = float(jnp.max(jnp.abs(out - ref)))
    scale = float(jnp.max(jnp.abs(ref))) + 1e-6
    assert err / scale < 5e-2, f"mismatch: max|diff|={err}, scale={scale}"

    print("KERNEL_OK")
</pallas_src>

<mosaic_0001>
module attributes {stable_mosaic.version = 11 : i64} {
  func.func @_matmul_bias_kernel(%arg0: i32, %arg1: i32, %arg2: i32, %arg3: memref<512x27xbf16, #tpu.memory_space<vmem>>, %arg4: memref<27x64xbf16, #tpu.memory_space<vmem>>, %arg5: memref<1x64xf32, #tpu.memory_space<vmem>>, %arg6: memref<512x64xbf16, #tpu.memory_space<vmem>>, %arg7: memref<512x64xf32, #tpu.memory_space<vmem>>) attributes {dimension_semantics = [#tpu.dimension_semantics<parallel>, #tpu.dimension_semantics<parallel>, #tpu.dimension_semantics<arbitrary>], iteration_bounds = array<i64: 4, 1, 1>, scalar_prefetch = 0 : i64, scratch_operands = 1 : i64, tpu.core_type = #tpu.core_type<tc>, window_params = [{transform_indices = @transform_0, window_bounds = array<i64: 512, 27>}, {transform_indices = @transform_1, window_bounds = array<i64: 27, 64>}, {transform_indices = @transform_2, window_bounds = array<i64: 1, 64>}, {transform_indices = @transform_3, window_bounds = array<i64: 512, 64>}]} {
    %c0_i32 = arith.constant 0 : i32
    %0 = arith.cmpi eq, %arg2, %c0_i32 : i32
    %1 = arith.extui %0 : i1 to i32
    %c0_i32_0 = arith.constant 0 : i32
    %2 = arith.cmpi ne, %1, %c0_i32_0 : i32
    scf.if %2 {
      %cst_10 = arith.constant 0.000000e+00 : f32
      %12 = vector.broadcast %cst_10 : f32 to vector<512x64xf32>
      %c0_11 = arith.constant 0 : index
      %c0_12 = arith.constant 0 : index
      %13 = vector.load %arg7[%c0_11, %c0_12] : memref<512x64xf32, #tpu.memory_space<vmem>>, vector<512x64xf32>
      tpu.vector_store %arg7[%c0_11, %c0_12], %12 {strides = array<i32>} : memref<512x64xf32, #tpu.memory_space<vmem>>, vector<512x64xf32>,
    } else {
    }
    %c0 = arith.constant 0 : index
    %c0_1 = arith.constant 0 : index
    %3 = vector.load %arg7[%c0, %c0_1] : memref<512x64xf32, #tpu.memory_space<vmem>>, vector<512x64xf32>
    %c0_2 = arith.constant 0 : index
    %c0_3 = arith.constant 0 : index
    %4 = vector.load %arg3[%c0_2, %c0_3] : memref<512x27xbf16, #tpu.memory_space<vmem>>, vector<512x27xbf16>
    %c0_4 = arith.constant 0 : index
    %c0_5 = arith.constant 0 : index
    %5 = vector.load %arg4[%c0_4, %c0_5] : memref<27x64xbf16, #tpu.memory_space<vmem>>, vector<27x64xbf16>
    %cst = arith.constant dense<0.000000e+00> : vector<512x64xf32>
    %6 = tpu.matmul %4, %5, %cst {dimension_numbers = #tpu.dot_dimension_numbers<[1], [0], [0], [1], [0, 0, 1, 1], [], []>} : vector<512x27xbf16>, vector<27x64xbf16>, vector<512x64xf32> -> vector<512x64xf32>
    %7 = arith.addf %3, %6 : vector<512x64xf32>
    %c0_6 = arith.constant 0 : index
    %c0_7 = arith.constant 0 : index
    %8 = vector.load %arg7[%c0_6, %c0_7] : memref<512x64xf32, #tpu.memory_space<vmem>>, vector<512x64xf32>
    tpu.vector_store %arg7[%c0_6, %c0_7], %7 {strides = array<i32>} : memref<512x64xf32, #tpu.memory_space<vmem>>, vector<512x64xf32>,
    %c0_i32_8 = arith.constant 0 : i32
    %9 = arith.cmpi eq, %arg2, %c0_i32_8 : i32
    %10 = arith.extui %9 : i1 to i32
    %c0_i32_9 = arith.constant 0 : i32
    %11 = arith.cmpi ne, %10, %c0_i32_9 : i32
    scf.if %11 {
      %c0_10 = arith.constant 0 : index
      %c0_11 = arith.constant 0 : index
      %12 = vector.load %arg7[%c0_10, %c0_11] : memref<512x64xf32, #tpu.memory_space<vmem>>, vector<512x64xf32>
      %c0_12 = arith.constant 0 : index
      %c0_13 = arith.constant 0 : index
      %13 = vector.load %arg5[%c0_12, %c0_13] : memref<1x64xf32, #tpu.memory_space<vmem>>, vector<1x64xf32>
      %14 = vector.broadcast %13 : vector<1x64xf32> to vector<512x64xf32>
      %15 = arith.addf %12, %14 : vector<512x64xf32>
      %cst_14 = arith.constant 0.000000e+00 : f32
      %16 = vector.broadcast %cst_14 : f32 to vector<512x64xf32>
      %17 = arith.maximumf %15, %16 : vector<512x64xf32>
      %18 = arith.truncf %17 : vector<512x64xf32> to vector<512x64xbf16>
      %c0_15 = arith.constant 0 : index
      %c0_16 = arith.constant 0 : index
      %19 = vector.load %arg6[%c0_15, %c0_16] : memref<512x64xbf16, #tpu.memory_space<vmem>>, vector<512x64xbf16>
      tpu.vector_store %arg6[%c0_15, %c0_16], %18 {strides = array<i32>} : memref<512x64xbf16, #tpu.memory_space<vmem>>, vector<512x64xbf16>,
    } else {
    }
    return
  }
  func.func @transform_0(%arg0: i32, %arg1: i32, %arg2: i32) -> (i32, i32) {
    %c0_i32 = arith.constant 0 : i32
    return %arg0, %arg2 : i32, i32
  }
  func.func @transform_1(%arg0: i32, %arg1: i32, %arg2: i32) -> (i32, i32) {
    %c0_i32 = arith.constant 0 : i32
    return %arg2, %arg1 : i32, i32
  }
  func.func @transform_2(%arg0: i32, %arg1: i32, %arg2: i32) -> (i32, i32) {
    %c0_i32 = arith.constant 0 : i32
    %c0_i32_0 = arith.constant 0 : i32
    return %c0_i32, %arg1 : i32, i32
  }
  func.func @transform_3(%arg0: i32, %arg1: i32, %arg2: i32) -> (i32, i32) {
    %c0_i32 = arith.constant 0 : i32
    return %arg0, %arg1 : i32, i32
  }
}

</mosaic_0001>

<llo_original>
// kernel: tpu_custom_call.1
$region0: #{tpu_custom_call.1}
  #allocation0 [shape = 'u32[]', space=smem, size = 0x4, offset = 0x4, fixed_abs, tag = 'smem constant byte address 0x4 - core index']
  #allocation1 [shape = 'u32[144,128]{1,0:T(1,128)}', space=vmem, size = 0x12000, scoped, tag = 'internal scratch']
  #allocation2 [shape = 'f32[512,64]{1,0:T(8,128)}', space=vmem, size = 0x40000, scoped, tag = 'scratch operand']
  %s0 = inlined_call_operand.vmem [shape: bf16[2048,27], index: 0, kind: input, shape index: {}]
  %s1 = inlined_call_operand.vmem [shape: bf16[27,64], index: 1, kind: input, shape index: {}]
  %s2 = inlined_call_operand.vmem [shape: f32[1,64], index: 2, kind: input, shape index: {}]
  %s3 = inlined_call_operand.vmem [shape: bf16[2048,64], index: 3, kind: output, shape index: {}]
  %s4 = sld [smem:[#allocation0]]
  $region53: #{tpu_custom_call.1} parent=0
    _
  %s6 = ssub.s32 1, %s4
  %s7 = scalar_select 0, %s6, %s4
  loop: start=0, step=1, limit=6
  $region2: #{tpu_custom_call.1} parent=0 // loop_pre_header
    _
  $region3: #{tpu_custom_call.1} parent=0 // loop_header
    %s9 = sphi 0, %s13
    %p10 = scmp.ge.s32.totalorder %s9, 6
    %s16 = sphi 0, %s35
    %s17 = sphi 0, %s31
    %s18 = sphi 0, %s27
    %s19 = sphi 0, %s16
    %s20 = sphi 0, %s17
    %s21 = sphi 0, %s18
    %s22 = sphi 0, %s19
    %s23 = sphi 0, %s20
    %s24 = sphi 0, %s21
    %s40 = sphi 0, %s42
    %s43 = sphi 0, %s40
    %s44 = sphi 0, %s43
    %s60 = sphi 0, %s44
    %s68 = sphi 0, %s70
    %s71 = sphi 0, %s68
    %s72 = sphi 0, %s71
    %s88 = sphi 0, %s72
    %s94 = sphi 0, %s96
    %s97 = sphi 0, %s94
    %s98 = sphi 0, %s97
    %s114 = sphi 0, %s98
    %s122 = sphi 0, %s124
    %s125 = sphi 0, %s122
    %s126 = sphi 0, %s125
    %s142 = sphi 0, %s126
  $region4: #{tpu_custom_call.1} parent=0 // loop_header_branch
    %12 = sbr.rel (%p10) target = $region8
  $region5: #{tpu_custom_call.1} parent=0 // loop_body
    %s14 = ssub.s32 %s9, 1
    %s15 = ssub.s32 %s9, 2
    %s25 = sadd.s32 1, %s18
    %p26 = scmp.ge.s32.totalorder %s25, 1
    %s27 = scalar_select %p26, 0, %s25
    %s28 = sadd.s32 1, %s17
    %s29 = scalar_select %p26, %s28, %s17
    %p30 = scmp.ge.s32.totalorder %s29, 1
    %s31 = scalar_select %p30, 0, %s29
    %s32 = sadd.s32 1, %s16
    %s33 = scalar_select %p30, %s32, %s16
    %p34 = scmp.ge.s32.totalorder %s33, 4
    %s35 = scalar_select %p34, 0, %s33
    %s36 = ssub.s32 %s16, %s35
    %s37 = ssub.s32 %s18, %s27
    %s38 = sor.u32 %s36, %s37
    %p39 = scmp.eq.s32.totalorder %s38, 0
    %s41 = sadd.s32 %s40, 1
    %s42 = scalar_select %p39, %s40, %s41
    %p45 = pneg %p39
    %p46 = scmp.eq.s32.totalorder %s9, 3
    %p47 = por %p45, %p46
    %p48 = scmp.ne.s32.totalorder %s40, %s43
    %p49 = scmp.eq.s32.totalorder %s9, 0
    %p50 = por %p48, %p49
    %p51 = scmp.ne.s32.totalorder %s40, %s43
    %p52 = scmp.eq.s32.totalorder %s14, 3
    %p53 = por %p51, %p52
    %p54 = scmp.ne.s32.totalorder %s43, %s44
    %p55 = scmp.eq.s32.totalorder %s14, 0
    %p56 = por %p54, %p55
    %p57 = scmp.ne.s32.totalorder %s43, %s44
    %p58 = scmp.eq.s32.totalorder %s15, 3
    %p59 = por %p57, %p58
    %p61 = scmp.ne.s32.totalorder %s44, %s60
    %p62 = scmp.eq.s32.totalorder %s15, 0
    %p63 = por %p61, %p62
    %s64 = ssub.s32 %s18, %s27
    %s65 = ssub.s32 %s17, %s31
    %s66 = sor.u32 %s64, %s65
    %p67 = scmp.eq.s32.totalorder %s66, 0
    %s69 = sadd.s32 %s68, 1
    %s70 = scalar_select %p67, %s68, %s69
    %p73 = pneg %p67
    %p74 = scmp.eq.s32.totalorder %s9, 3
    %p75 = por %p73, %p74
    %p76 = scmp.ne.s32.totalorder %s68, %s71
    %p77 = scmp.eq.s32.totalorder %s9, 0
    %p78 = por %p76, %p77
    %p79 = scmp.ne.s32.totalorder %s68, %s71
    %p80 = scmp.eq.s32.totalorder %s14, 3
    %p81 = por %p79, %p80
    %p82 = scmp.ne.s32.totalorder %s71, %s72
    %p83 = scmp.eq.s32.totalorder %s14, 0
    %p84 = por %p82, %p83
    %p85 = scmp.ne.s32.totalorder %s71, %s72
    %p86 = scmp.eq.s32.totalorder %s15, 3
    %p87 = por %p85, %p86
    %p89 = scmp.ne.s32.totalorder %s72, %s88
    %p90 = scmp.eq.s32.totalorder %s15, 0
    %p91 = por %p89, %p90
    %s92 = ssub.s32 %s17, %s31
    %p93 = scmp.eq.s32.totalorder %s92, 0
    %s95 = sadd.s32 %s94, 1
    %s96 = scalar_select %p93, %s94, %s95
    %p99 = pneg %p93
    %p100 = scmp.eq.s32.totalorder %s9, 3
    %p101 = por %p99, %p100
    %p102 = scmp.ne.s32.totalorder %s94, %s97
    %p103 = scmp.eq.s32.totalorder %s9, 0
    %p104 = por %p102, %p103
    %p105 = scmp.ne.s32.totalorder %s94, %s97
    %p106 = scmp.eq.s32.totalorder %s14, 3
    %p107 = por %p105, %p106
    %p108 = scmp.ne.s32.totalorder %s97, %s98
    %p109 = scmp.eq.s32.totalorder %s14, 0
    %p110 = por %p108, %p109
    %p111 = scmp.ne.s32.totalorder %s97, %s98
    %p112 = scmp.eq.s32.totalorder %s15, 3
    %p113 = por %p111, %p112
    %p115 = scmp.ne.s32.totalorder %s98, %s114
    %p116 = scmp.eq.s32.totalorder %s15, 0
    %p117 = por %p115, %p116
    %s118 = ssub.s32 %s16, %s35
    %s119 = ssub.s32 %s17, %s31
    %s120 = sor.u32 %s118, %s119
    %p121 = scmp.eq.s32.totalorder %s120, 0
    %s123 = sadd.s32 %s122, 1
    %s124 = scalar_select %p121, %s122, %s123
    %p127 = pneg %p121
    %p128 = scmp.eq.s32.totalorder %s9, 3
    %p129 = por %p127, %p128
    %p130 = scmp.ne.s32.totalorder %s122, %s125
    %p131 = scmp.eq.s32.totalorder %s9, 0
    %p132 = por %p130, %p131
    %p133 = scmp.ne.s32.totalorder %s122, %s125
    %p134 = scmp.eq.s32.totalorder %s14, 3
    %p135 = por %p133, %p134
    %p136 = scmp.ne.s32.totalorder %s125, %s126
    %p137 = scmp.eq.s32.totalorder %s14, 0
    %p138 = por %p136, %p137
    %p139 = scmp.ne.s32.totalorder %s125, %s126
    %p140 = scmp.eq.s32.totalorder %s15, 3
    %p141 = por %p139, %p140
    %p143 = scmp.ne.s32.totalorder %s126, %s142
    %p144 = scmp.eq.s32.totalorder %s15, 0
    %p145 = por %p143, %p144
    %p146 = scmp.le.s32.totalorder 1, %s9
    %p147 = scmp.lt.s32.totalorder %s9, 5
    %p148 = pnand %p146, %p147
    %p149 = pneg %p148
    // Predicated region
    $region9: #{tpu_custom_call.1} parent=5 // pred_check
      _
    $region10: #{tpu_custom_call.1} parent=5 // pred_check_branch
      %151 = sbr.rel (%p148) target = $region12
    $region11: #{tpu_custom_call.1} parent=5 // pred_region
      %s152 = ssub.s32 %s9, 1
      // Predicated region
      $region13: #{tpu_custom_call.1} parent=11 // pred_check
        %p153 = pneg %p84
      $region14: #{tpu_custom_call.1} parent=11 // pred_check_branch
        %155 = sbr.rel (%p153) target = $region16
      $region15: #{tpu_custom_call.1} parent=11 // pred_region
        %s156 = smul.u32 4, %s21
        %p157 = scmp.lt.s32.totalorder %s156, 3
        %s158 = scalar_select %p157, %s156, 3
        %p159 = scmp.lt.s32.totalorder %s20, 0
        %s160 = scalar_select %p159, %s20, 0
        %s161 = sadd.s32 %s160, %s158
        %s162 = smul.addr %s161, 4
        %s163 = scalar_lea.vmem %s1, %s162
        %s164 = smul.u32 4, %s21
      $region16: #{tpu_custom_call.1} parent=11 // pred_fallthru
        _
      // Predicated region
      $region17: #{tpu_custom_call.1} parent=11 // pred_check
        %p165 = pneg %p110
      $region18: #{tpu_custom_call.1} parent=11 // pred_check_branch
        %167 = sbr.rel (%p165) target = $region20
      $region19: #{tpu_custom_call.1} parent=11 // pred_region
        %p168 = scmp.lt.s32.totalorder %s20, 0
        %s169 = scalar_select %p168, %s20, 0
        %s170 = scalar_lea.vmem %s2, %s169
      $region20: #{tpu_custom_call.1} parent=11 // pred_fallthru
        _
    $region12: #{tpu_custom_call.1} parent=5 // pred_fallthru
      _
    %p171 = scmp.lt.s32.totalorder %s9, 4
    // Predicated region
    $region21: #{tpu_custom_call.1} parent=5 // pred_check
      %p172 = pneg %p171
    $region22: #{tpu_custom_call.1} parent=5 // pred_check_branch
      %174 = sbr.rel (%p172) target = $region24
    $region23: #{tpu_custom_call.1} parent=5 // pred_region
      // Predicated region
      $region25: #{tpu_custom_call.1} parent=23 // pred_check
        %p175 = pneg %p50
      $region26: #{tpu_custom_call.1} parent=23 // pred_check_branch
        %177 = sbr.rel (%p175) target = $region28
      $region27: #{tpu_custom_call.1} parent=23 // pred_region
        %s178 = smul.u32 64, %s16
        %p179 = scmp.lt.s32.totalorder %s178, 255
        %s180 = scalar_select %p179, %s178, 255
        %p181 = scmp.lt.s32.totalorder %s18, 0
        %s182 = scalar_select %p181, %s18, 0
        %s183 = sadd.s32 %s182, %s180
        %s184 = smul.addr %s183, 4
        %s185 = scalar_lea.vmem %s0, %s184
        %s186 = smul.u32 64, %s16
      $region28: #{tpu_custom_call.1} parent=23 // pred_fallthru
        _
    $region24: #{tpu_custom_call.1} parent=5 // pred_fallthru
      _
    %p187 = scmp.le.s32.totalorder 1, %s9
    %p188 = scmp.lt.s32.totalorder %s9, 5
    %p189 = pnand %p187, %p188
    %p190 = pneg %p189
    // Predicated region
    $region29: #{tpu_custom_call.1} parent=5 // pred_check
      _
    $region30: #{tpu_custom_call.1} parent=5 // pred_check_branch
      %192 = sbr.rel (%p189) target = $region32
    $region31: #{tpu_custom_call.1} parent=5 // pred_region
      %s193 = ssub.s32 %s9, 1
      %s194 = smul.u32 64, %s19
      %p195 = scmp.lt.s32.totalorder %s194, 255
      %s196 = scalar_select %p195, %s194, 255
      %p197 = scmp.lt.s32.totalorder %s21, 0
      %s198 = scalar_select %p197, %s21, 0
      %s199 = sadd.s32 %s198, %s196
      %s200 = smul.addr %s199, 4
      %s201 = scalar_lea.vmem %s0, %s200
      %p202 = pneg %p56
      %p203 = pneg %p53
      %s204 = smul.u32 4, %s21
      %p205 = scmp.lt.s32.totalorder %s204, 3
      %s206 = scalar_select %p205, %s204, 3
      %p207 = scmp.lt.s32.totalorder %s20, 0
      %s208 = scalar_select %p207, %s20, 0
      %s209 = sadd.s32 %s208, %s206
      %s210 = smul.addr %s209, 4
      %s211 = scalar_lea.vmem %s1, %s210
      %p212 = pneg %p84
      %p213 = pneg %p81
      %p214 = scmp.lt.s32.totalorder %s20, 0
      %s215 = scalar_select %p214, %s20, 0
      %s216 = scalar_lea.vmem %s2, %s215
      %p217 = pneg %p110
      %p218 = pneg %p107
      %p219 = pneg %p138
      %p220 = pneg %p135
      %s221 = smul.u32 64, %s19
      %p222 = scmp.lt.s32.totalorder %s221, 255
      %s223 = scalar_select %p222, %s221, 255
      %p224 = scmp.lt.s32.totalorder %s20, 0
      %s225 = scalar_select %p224, %s20, 0
      %s226 = sadd.s32 %s225, %s223
      %s227 = smul.addr %s226, 4
      %s228 = scalar_lea.vmem %s3, %s227
      %s229 = smul.u32 64, %s19
      %p230 = scmp.lt.s32.totalorder %s229, 255
      %s231 = scalar_select %p230, %s229, 255
      %p232 = scmp.lt.s32.totalorder %s21, 0
      %s233 = scalar_select %p232, %s21, 0
      %s234 = sadd.s32 %s233, %s231
      %s235 = smul.addr %s234, 4
      %s236 = scalar_lea.vmem %s0, %s235
      %s237 = smul.u32 64, %s19
      %s238 = smul.u32 4, %s21
      %p239 = scmp.lt.s32.totalorder %s238, 3
      %s240 = scalar_select %p239, %s238, 3
      %p241 = scmp.lt.s32.totalorder %s20, 0
      %s242 = scalar_select %p241, %s20, 0
      %s243 = sadd.s32 %s242, %s240
      %s244 = smul.addr %s243, 4
      %s245 = scalar_lea.vmem %s1, %s244
      %s246 = smul.u32 4, %s21
      %p247 = scmp.lt.s32.totalorder %s20, 0
      %s248 = scalar_select %p247, %s20, 0
      %s249 = scalar_lea.vmem %s2, %s248
      %s250 = smul.u32 64, %s19
      %p251 = scmp.lt.s32.totalorder %s250, 255
      %s252 = scalar_select %p251, %s250, 255
      %p253 = scmp.lt.s32.totalorder %s20, 0
      %s254 = scalar_select %p253, %s20, 0
      %s255 = sadd.s32 %s254, %s252
      %s256 = smul.addr %s255, 4
      %s257 = scalar_lea.vmem %s3, %s256
      %s258 = smul.u32 64, %s19
      %p260 = scmp.eq.s32.totalorder %s21, 0
      // Predicated region
      $region33: #{tpu_custom_call.1} parent=31 // pred_check
        %p261 = pneg %p260
      $region34: #{tpu_custom_call.1} parent=31 // pred_check_branch
        %263 = sbr.rel (%p261) target = $region36
      $region35: #{tpu_custom_call.1} parent=31 // pred_region
        %vm264 = vcmask 523264
        %265 = vst.msk [vmem:[#allocation2] sm:$0xff] %vm264, 0.0
        %266 = vst.msk [vmem:[#allocation2 + $0x8] sm:$0xff] %vm264, 0.0
        %267 = vst.msk [vmem:[#allocation2 + $0x10] sm:$0xff] %vm264, 0.0
        %268 = vst.msk [vmem:[#allocation2 + $0x18] sm:$0xff] %vm264, 0.0
        %269 = vst.msk [vmem:[#allocation2 + $0x20] sm:$0xff] %vm264, 0.0
        %270 = vst.msk [vmem:[#allocation2 + $0x28] sm:$0xff] %vm264, 0.0
        %271 = vst.msk [vmem:[#allocation2 + $0x30] sm:$0xff] %vm264, 0.0
        %272 = vst.msk [vmem:[#allocation2 + $0x38] sm:$0xff] %vm264, 0.0
        %273 = vst.msk [vmem:[#allocation2 + $0x40] sm:$0xff] %vm264, 0.0
        %274 = vst.msk [vmem:[#allocation2 + $0x48] sm:$0xff] %vm264, 0.0
        %275 = vst.msk [vmem:[#allocation2 + $0x50] sm:$0xff] %vm264, 0.0
        %276 = vst.msk [vmem:[#allocation2 + $0x58] sm:$0xff] %vm264, 0.0
        %277 = vst.msk [vmem:[#allocation2 + $0x60] sm:$0xff] %vm264, 0.0
        %278 = vst.msk [vmem:[#allocation2 + $0x68] sm:$0xff] %vm264, 0.0
        %279 = vst.msk [vmem:[#allocation2 + $0x70] sm:$0xff] %vm264, 0.0
        %280 = vst.msk [vmem:[#allocation2 + $0x78] sm:$0xff] %vm264, 0.0
        %281 = vst.msk [vmem:[#allocation2 + $0x80] sm:$0xff] %vm264, 0.0
        %282 = vst.msk [vmem:[#allocation2 + $0x88] sm:$0xff] %vm264, 0.0
        %283 = vst.msk [vmem:[#allocation2 + $0x90] sm:$0xff] %vm264, 0.0
        %284 = vst.msk [vmem:[#allocation2 + $0x98] sm:$0xff] %vm264, 0.0
        %285 = vst.msk [vmem:[#allocation2 + $0xa0] sm:$0xff] %vm264, 0.0
        %286 = vst.msk [vmem:[#allocation2 + $0xa8] sm:$0xff] %vm264, 0.0
        %287 = vst.msk [vmem:[#allocation2 + $0xb0] sm:$0xff] %vm264, 0.0
        %288 = vst.msk [vmem:[#allocation2 + $0xb8] sm:$0xff] %vm264, 0.0
        %289 = vst.msk [vmem:[#allocation2 + $0xc0] sm:$0xff] %vm264, 0.0
        %290 = vst.msk [vmem:[#allocation2 + $0xc8] sm:$0xff] %vm264, 0.0
        %291 = vst.msk [vmem:[#allocation2 + $0xd0] sm:$0xff] %vm264, 0.0
        %292 = vst.msk [vmem:[#allocation2 + $0xd8] sm:$0xff] %vm264, 0.0
        %293 = vst.msk [vmem:[#allocation2 + $0xe0] sm:$0xff] %vm264, 0.0
        %294 = vst.msk [vmem:[#allocation2 + $0xe8] sm:$0xff] %vm264, 0.0
        %295 = vst.msk [vmem:[#allocation2 + $0xf0] sm:$0xff] %vm264, 0.0
        %296 = vst.msk [vmem:[#allocation2 + $0xf8] sm:$0xff] %vm264, 0.0
        %297 = vst.msk [vmem:[#allocation2 + $0x100] sm:$0xff] %vm264, 0.0
        %298 = vst.msk [vmem:[#allocation2 + $0x108] sm:$0xff] %vm264, 0.0
        %299 = vst.msk [vmem:[#allocation2 + $0x110] sm:$0xff] %vm264, 0.0
        %300 = vst.msk [vmem:[#allocation2 + $0x118] sm:$0xff] %vm264, 0.0
        %301 = vst.msk [vmem:[#allocation2 + $0x120] sm:$0xff] %vm264, 0.0
        %302 = vst.msk [vmem:[#allocation2 + $0x128] sm:$0xff] %vm264, 0.0
        %303 = vst.msk [vmem:[#allocation2 + $0x130] sm:$0xff] %vm264, 0.0
        %304 = vst.msk [vmem:[#allocation2 + $0x138] sm:$0xff] %vm264, 0.0
        %305 = vst.msk [vmem:[#allocation2 + $0x140] sm:$0xff] %vm264, 0.0
        %306 = vst.msk [vmem:[#allocation2 + $0x148] sm:$0xff] %vm264, 0.0
        %307 = vst.msk [vmem:[#allocation2 + $0x150] sm:$0xff] %vm264, 0.0
        %308 = vst.msk [vmem:[#allocation2 + $0x158] sm:$0xff] %vm264, 0.0
        %309 = vst.msk [vmem:[#allocation2 + $0x160] sm:$0xff] %vm264, 0.0
        %310 = vst.msk [vmem:[#allocation2 + $0x168] sm:$0xff] %vm264, 0.0
        %311 = vst.msk [vmem:[#allocation2 + $0x170] sm:$0xff] %vm264, 0.0
        %312 = vst.msk [vmem:[#allocation2 + $0x178] sm:$0xff] %vm264, 0.0
        %313 = vst.msk [vmem:[#allocation2 + $0x180] sm:$0xff] %vm264, 0.0
        %314 = vst.msk [vmem:[#allocation2 + $0x188] sm:$0xff] %vm264, 0.0
        %315 = vst.msk [vmem:[#allocation2 + $0x190] sm:$0xff] %vm264, 0.0
        %316 = vst.msk [vmem:[#allocation2 + $0x198] sm:$0xff] %vm264, 0.0
        %317 = vst.msk [vmem:[#allocation2 + $0x1a0] sm:$0xff] %vm264, 0.0
        %318 = vst.msk [vmem:[#allocation2 + $0x1a8] sm:$0xff] %vm264, 0.0
        %319 = vst.msk [vmem:[#allocation2 + $0x1b0] sm:$0xff] %vm264, 0.0
        %320 = vst.msk [vmem:[#allocation2 + $0x1b8] sm:$0xff] %vm264, 0.0
        %321 = vst.msk [vmem:[#allocation2 + $0x1c0] sm:$0xff] %vm264, 0.0
        %322 = vst.msk [vmem:[#allocation2 + $0x1c8] sm:$0xff] %vm264, 0.0
        %323 = vst.msk [vmem:[#allocation2 + $0x1d0] sm:$0xff] %vm264, 0.0
        %324 = vst.msk [vmem:[#allocation2 + $0x1d8] sm:$0xff] %vm264, 0.0
        %325 = vst.msk [vmem:[#allocation2 + $0x1e0] sm:$0xff] %vm264, 0.0
        %326 = vst.msk [vmem:[#allocation2 + $0x1e8] sm:$0xff] %vm264, 0.0
        %327 = vst.msk [vmem:[#allocation2 + $0x1f0] sm:$0xff] %vm264, 0.0
        %328 = vst.msk [vmem:[#allocation2 + $0x1f8] sm:$0xff] %vm264, 0.0
      $region36: #{tpu_custom_call.1} parent=31 // pred_fallthru
        _
      %v329 = vld [vmem:[#allocation2] sm:$0xff]
      %v330 = vld [vmem:[#allocation2 + $0x8] sm:$0xff]
      %v331 = vld [vmem:[#allocation2 + $0x10] sm:$0xff]
      %v332 = vld [vmem:[#allocation2 + $0x18] sm:$0xff]
      %v333 = vld [vmem:[#allocation2 + $0x20] sm:$0xff]
      %v334 = vld [vmem:[#allocation2 + $0x28] sm:$0xff]
      %v335 = vld [vmem:[#allocation2 + $0x30] sm:$0xff]
      %v336 = vld [vmem:[#allocation2 + $0x38] sm:$0xff]
      %v337 = vld [vmem:[#allocation2 + $0x40] sm:$0xff]
      %v338 = vld [vmem:[#allocation2 + $0x48] sm:$0xff]
      %v339 = vld [vmem:[#allocation2 + $0x50] sm:$0xff]
      %v340 = vld [vmem:[#allocation2 + $0x58] sm:$0xff]
      %v341 = vld [vmem:[#allocation2 + $0x60] sm:$0xff]
      %v342 = vld [vmem:[#allocation2 + $0x68] sm:$0xff]
      %v343 = vld [vmem:[#allocation2 + $0x70] sm:$0xff]
      %v344 = vld [vmem:[#allocation2 + $0x78] sm:$0xff]
      %v345 = vld [vmem:[#allocation2 + $0x80] sm:$0xff]
      %v346 = vld [vmem:[#allocation2 + $0x88] sm:$0xff]
      %v347 = vld [vmem:[#allocation2 + $0x90] sm:$0xff]
      %v348 = vld [vmem:[#allocation2 + $0x98] sm:$0xff]
      %v349 = vld [vmem:[#allocation2 + $0xa0] sm:$0xff]
      %v350 = vld [vmem:[#allocation2 + $0xa8] sm:$0xff]
      %v351 = vld [vmem:[#allocation2 + $0xb0] sm:$0xff]
      %v352 = vld [vmem:[#allocation2 + $0xb8] sm:$0xff]
      %v353 = vld [vmem:[#allocation2 + $0xc0] sm:$0xff]
      %v354 = vld [vmem:[#allocation2 + $0xc8] sm:$0xff]
      %v355 = vld [vmem:[#allocation2 + $0xd0] sm:$0xff]
      %v356 = vld [vmem:[#allocation2 + $0xd8] sm:$0xff]
      %v357 = vld [vmem:[#allocation2 + $0xe0] sm:$0xff]
      %v358 = vld [vmem:[#allocation2 + $0xe8] sm:$0xff]
      %v359 = vld [vmem:[#allocation2 + $0xf0] sm:$0xff]
      %v360 = vld [vmem:[#allocation2 + $0xf8] sm:$0xff]
      %v361 = vld [vmem:[#allocation2 + $0x100] sm:$0xff]
      %v362 = vld [vmem:[#allocation2 + $0x108] sm:$0xff]
      %v363 = vld [vmem:[#allocation2 + $0x110] sm:$0xff]
      %v364 = vld [vmem:[#allocation2 + $0x118] sm:$0xff]
      %v365 = vld [vmem:[#allocation2 + $0x120] sm:$0xff]
      %v366 = vld [vmem:[#allocation2 + $0x128] sm:$0xff]
      %v367 = vld [vmem:[#allocation2 + $0x130] sm:$0xff]
      %v368 = vld [vmem:[#allocation2 + $0x138] sm:$0xff]
      %v369 = vld [vmem:[#allocation2 + $0x140] sm:$0xff]
      %v370 = vld [vmem:[#allocation2 + $0x148] sm:$0xff]
      %v371 = vld [vmem:[#allocation2 + $0x150] sm:$0xff]
      %v372 = vld [vmem:[#allocation2 + $0x158] sm:$0xff]
      %v373 = vld [vmem:[#allocation2 + $0x160] sm:$0xff]
      %v374 = vld [vmem:[#allocation2 + $0x168] sm:$0xff]
      %v375 = vld [vmem:[#allocation2 + $0x170] sm:$0xff]
      %v376 = vld [vmem:[#allocation2 + $0x178] sm:$0xff]
      %v377 = vld [vmem:[#allocation2 + $0x180] sm:$0xff]
      %v378 = vld [vmem:[#allocation2 + $0x188] sm:$0xff]
      %v379 = vld [vmem:[#allocation2 + $0x190] sm:$0xff]
      %v380 = vld [vmem:[#allocation2 + $0x198] sm:$0xff]
      %v381 = vld [vmem:[#allocation2 + $0x1a0] sm:$0xff]
      %v382 = vld [vmem:[#allocation2 + $0x1a8] sm:$0xff]
      %v383 = vld [vmem:[#allocation2 + $0x1b0] sm:$0xff]
      %v384 = vld [vmem:[#allocation2 + $0x1b8] sm:$0xff]
      %v385 = vld [vmem:[#allocation2 + $0x1c0] sm:$0xff]
      %v386 = vld [vmem:[#allocation2 + $0x1c8] sm:$0xff]
      %v387 = vld [vmem:[#allocation2 + $0x1d0] sm:$0xff]
      %v388 = vld [vmem:[#allocation2 + $0x1d8] sm:$0xff]
      %v389 = vld [vmem:[#allocation2 + $0x1e0] sm:$0xff]
      %v390 = vld [vmem:[#allocation2 + $0x1e8] sm:$0xff]
      %v391 = vld [vmem:[#allocation2 + $0x1f0] sm:$0xff]
      %v392 = vld [vmem:[#allocation2 + $0x1f8] sm:$0xff]
      %v393 = vld [vmem:[%s236] sm:$0xf]
      %v394 = vld [vmem:[%s236 + $0x4] sm:$0xf]
      %v395 = vld [vmem:[%s236 + $0x8] sm:$0xf]
      %v396 = vld [vmem:[%s236 + $0xc] sm:$0xf]
      %v397 = vld [vmem:[%s236 + $0x10] sm:$0xf]
      %v398 = vld [vmem:[%s236 + $0x14] sm:$0xf]
      %v399 = vld [vmem:[%s236 + $0x18] sm:$0xf]
      %v400 = vld [vmem:[%s236 + $0x1c] sm:$0xf]
      %v401 = vld [vmem:[%s236 + $0x20] sm:$0xf]
      %v402 = vld [vmem:[%s236 + $0x24] sm:$0xf]
      %v403 = vld [vmem:[%s236 + $0x28] sm:$0xf]
      %v404 = vld [vmem:[%s236 + $0x2c] sm:$0xf]
      %v405 = vld [vmem:[%s236 + $0x30] sm:$0xf]
      %v406 = vld [vmem:[%s236 + $0x34] sm:$0xf]
      %v407 = vld [vmem:[%s236 + $0x38] sm:$0xf]
      %v408 = vld [vmem:[%s236 + $0x3c] sm:$0xf]
      %v409 = vld [vmem:[%s236 + $0x40] sm:$0xf]
      %v410 = vld [vmem:[%s236 + $0x44] sm:$0xf]
      %v411 = vld [vmem:[%s236 + $0x48] sm:$0xf]
      %v412 = vld [vmem:[%s236 + $0x4c] sm:$0xf]
      %v413 = vld [vmem:[%s236 + $0x50] sm:$0xf]
      %v414 = vld [vmem:[%s236 + $0x54] sm:$0xf]
      %v415 = vld [vmem:[%s236 + $0x58] sm:$0xf]
      %v416 = vld [vmem:[%s236 + $0x5c] sm:$0xf]
      %v417 = vld [vmem:[%s236 + $0x60] sm:$0xf]
      %v418 = vld [vmem:[%s236 + $0x64] sm:$0xf]
      %v419 = vld [vmem:[%s236 + $0x68] sm:$0xf]
      %v420 = vld [vmem:[%s236 + $0x6c] sm:$0xf]
      %v421 = vld [vmem:[%s236 + $0x70] sm:$0xf]
      %v422 = vld [vmem:[%s236 + $0x74] sm:$0xf]
      %v423 = vld [vmem:[%s236 + $0x78] sm:$0xf]
      %v424 = vld [vmem:[%s236 + $0x7c] sm:$0xf]
      %v425 = vld [vmem:[%s236 + $0x80] sm:$0xf]
      %v426 = vld [vmem:[%s236 + $0x84] sm:$0xf]
      %v427 = vld [vmem:[%s236 + $0x88] sm:$0xf]
      %v428 = vld [vmem:[%s236 + $0x8c] sm:$0xf]
      %v429 = vld [vmem:[%s236 + $0x90] sm:$0xf]
      %v430 = vld [vmem:[%s236 + $0x94] sm:$0xf]
      %v431 = vld [vmem:[%s236 + $0x98] sm:$0xf]
      %v432 = vld [vmem:[%s236 + $0x9c] sm:$0xf]
      %v433 = vld [vmem:[%s236 + $0xa0] sm:$0xf]
      %v434 = vld [vmem:[%s236 + $0xa4] sm:$0xf]
      %v435 = vld [vmem:[%s236 + $0xa8] sm:$0xf]
      %v436 = vld [vmem:[%s236 + $0xac] sm:$0xf]
      %v437 = vld [vmem:[%s236 + $0xb0] sm:$0xf]
      %v438 = vld [vmem:[%s236 + $0xb4] sm:$0xf]
      %v439 = vld [vmem:[%s236 + $0xb8] sm:$0xf]
      %v440 = vld [vmem:[%s236 + $0xbc] sm:$0xf]
      %v441 = vld [vmem:[%s236 + $0xc0] sm:$0xf]
      %v442 = vld [vmem:[%s236 + $0xc4] sm:$0xf]
      %v443 = vld [vmem:[%s236 + $0xc8] sm:$0xf]
      %v444 = vld [vmem:[%s236 + $0xcc] sm:$0xf]
      %v445 = vld [vmem:[%s236 + $0xd0] sm:$0xf]
      %v446 = vld [vmem:[%s236 + $0xd4] sm:$0xf]
      %v447 = vld [vmem:[%s236 + $0xd8] sm:$0xf]
      %v448 = vld [vmem:[%s236 + $0xdc] sm:$0xf]
      %v449 = vld [vmem:[%s236 + $0xe0] sm:$0xf]
      %v450 = vld [vmem:[%s236 + $0xe4] sm:$0xf]
      %v451 = vld [vmem:[%s236 + $0xe8] sm:$0xf]
      %v452 = vld [vmem:[%s236 + $0xec] sm:$0xf]
      %v453 = vld [vmem:[%s236 + $0xf0] sm:$0xf]
      %v454 = vld [vmem:[%s236 + $0xf4] sm:$0xf]
      %v455 = vld [vmem:[%s236 + $0xf8] sm:$0xf]
      %v456 = vld [vmem:[%s236 + $0xfc] sm:$0xf]
      %v457 = vld [vmem:[%s245] sm:$0xf]
      %v458 = vld [vmem:[%s245 + $0x4] sm:$0xf]
      %v459 = vld [vmem:[%s245 + $0x8] sm:$0xf]
      %v460 = vld [vmem:[%s245 + $0xc] sm:$0x3]
      %v525 = vunpack.c.l.b16 %v393
      %v526 = vunpack.c.l.b16 %v394
      %v527 = vunpack.c.l.b16 %v395
      %v528 = vunpack.c.l.b16 %v396
      %v529 = vunpack.c.l.b16 %v397
      %v530 = vunpack.c.l.b16 %v398
      %v531 = vunpack.c.l.b16 %v399
      %v532 = vunpack.c.l.b16 %v400
      %v533 = vunpack.c.l.b16 %v401
      %v534 = vunpack.c.l.b16 %v402
      %v535 = vunpack.c.l.b16 %v403
      %v536 = vunpack.c.l.b16 %v404
      %v537 = vunpack.c.l.b16 %v405
      %v538 = vunpack.c.l.b16 %v406
      %v539 = vunpack.c.l.b16 %v407
      %v540 = vunpack.c.l.b16 %v408
      %v541 = vunpack.c.l.b16 %v409
      %v542 = vunpack.c.l.b16 %v410
      %v543 = vunpack.c.l.b16 %v411
      %v544 = vunpack.c.l.b16 %v412
      %v545 = vunpack.c.l.b16 %v413
      %v546 = vunpack.c.l.b16 %v414
      %v547 = vunpack.c.l.b16 %v415
      %v548 = vunpack.c.l.b16 %v416
      %v549 = vunpack.c.l.b16 %v417
      %v550 = vunpack.c.l.b16 %v418
      %v551 = vunpack.c.l.b16 %v419
      %v552 = vunpack.c.l.b16 %v420
      %v553 = vunpack.c.l.b16 %v421
      %v554 = vunpack.c.l.b16 %v422
      %v555 = vunpack.c.l.b16 %v423
      %v556 = vunpack.c.l.b16 %v424
      %v557 = vunpack.c.l.b16 %v425
      %v558 = vunpack.c.l.b16 %v426
      %v559 = vunpack.c.l.b16 %v427
      %v560 = vunpack.c.l.b16 %v428
      %v561 = vunpack.c.l.b16 %v429
      %v562 = vunpack.c.l.b16 %v430
      %v563 = vunpack.c.l.b16 %v431
      %v564 = vunpack.c.l.b16 %v432
      %v565 = vunpack.c.l.b16 %v433
      %v566 = vunpack.c.l.b16 %v434
      %v567 = vunpack.c.l.b16 %v435
      %v568 = vunpack.c.l.b16 %v436
      %v569 = vunpack.c.l.b16 %v437
      %v570 = vunpack.c.l.b16 %v438
      %v571 = vunpack.c.l.b16 %v439
      %v572 = vunpack.c.l.b16 %v440
      %v573 = vunpack.c.l.b16 %v441
      %v574 = vunpack.c.l.b16 %v442
      %v575 = vunpack.c.l.b16 %v443
      %v576 = vunpack.c.l.b16 %v444
      %v577 = vunpack.c.l.b16 %v445
      %v578 = vunpack.c.l.b16 %v446
      %v579 = vunpack.c.l.b16 %v447
      %v580 = vunpack.c.l.b16 %v448
      %v581 = vunpack.c.l.b16 %v449
      %v582 = vunpack.c.l.b16 %v450
      %v583 = vunpack.c.l.b16 %v451
      %v584 = vunpack.c.l.b16 %v452
      %v585 = vunpack.c.l.b16 %v453
      %v586 = vunpack.c.l.b16 %v454
      %v587 = vunpack.c.l.b16 %v455
      %v588 = vunpack.c.l.b16 %v456
      %v589 = vpack.c.b16 %v526, %v525
      %v590 = vpack.c.b16 %v528, %v527
      %v591 = vpack.c.b16 %v530, %v529
      %v592 = vpack.c.b16 %v532, %v531
      %v593 = vpack.c.b16 %v534, %v533
      %v594 = vpack.c.b16 %v536, %v535
      %v595 = vpack.c.b16 %v538, %v537
      %v596 = vpack.c.b16 %v540, %v539
      %v597 = vpack.c.b16 %v542, %v541
      %v598 = vpack.c.b16 %v544, %v543
      %v599 = vpack.c.b16 %v546, %v545
      %v600 = vpack.c.b16 %v548, %v547
      %v601 = vpack.c.b16 %v550, %v549
      %v602 = vpack.c.b16 %v552, %v551
      %v603 = vpack.c.b16 %v554, %v553
      %v604 = vpack.c.b16 %v556, %v555
      %v605 = vpack.c.b16 %v558, %v557
      %v606 = vpack.c.b16 %v560, %v559
      %v607 = vpack.c.b16 %v562, %v561
      %v608 = vpack.c.b16 %v564, %v563
      %v609 = vpack.c.b16 %v566, %v565
      %v610 = vpack.c.b16 %v568, %v567
      %v611 = vpack.c.b16 %v570, %v569
      %v612 = vpack.c.b16 %v572, %v571
      %v613 = vpack.c.b16 %v574, %v573
      %v614 = vpack.c.b16 %v576, %v575
      %v615 = vpack.c.b16 %v578, %v577
      %v616 = vpack.c.b16 %v580, %v579
      %v617 = vpack.c.b16 %v582, %v581
      %v618 = vpack.c.b16 %v584, %v583
      %v619 = vpack.c.b16 %v586, %v585
      %v620 = vpack.c.b16 %v588, %v587
      %v625 = vunpack.c.l.b16 %v457
      %v626 = vunpack.c.l.b16 %v458
      %v627 = vunpack.c.l.b16 %v459
      %v628 = vunpack.c.l.b16 %v460
      %v629 = vpack.c.b16 %v626, %v625
      %v630 = vpack.c.b16 %v628, %v627
      %vm632 = vcmask 220160
      %v634 = vsel %vm632, %v589, 0
      %v637 = vsel %vm632, %v590, 0
      %v640 = vsel %vm632, %v591, 0
      %v643 = vsel %vm632, %v592, 0
      %v646 = vsel %vm632, %v593, 0
      %v649 = vsel %vm632, %v594, 0
      %v652 = vsel %vm632, %v595, 0
      %v655 = vsel %vm632, %v596, 0
      %v658 = vsel %vm632, %v597, 0
      %v661 = vsel %vm632, %v598, 0
      %v664 = vsel %vm632, %v599, 0
      %v667 = vsel %vm632, %v600, 0
      %v670 = vsel %vm632, %v601, 0
      %v673 = vsel %vm632, %v602, 0
      %v676 = vsel %vm632, %v603, 0
      %v679 = vsel %vm632, %v604, 0
      %v682 = vsel %vm632, %v605, 0
      %v685 = vsel %vm632, %v606, 0
      %v688 = vsel %vm632, %v607, 0
      %v691 = vsel %vm632, %v608, 0
      %v694 = vsel %vm632, %v609, 0
      %v697 = vsel %vm632, %v610, 0
      %v700 = vsel %vm632, %v611, 0
      %v703 = vsel %vm632, %v612, 0
      %v706 = vsel %vm632, %v613, 0
      %v709 = vsel %vm632, %v614, 0
      %v712 = vsel %vm632, %v615, 0
      %v715 = vsel %vm632, %v616, 0
      %v718 = vsel %vm632, %v617, 0
      %v721 = vsel %vm632, %v618, 0
      %v724 = vsel %vm632, %v619, 0
      %v727 = vsel %vm632, %v620, 0
      %vm729 = vcmask 1044480
      %vm730 = vcmask 1045504
      %v731 = vsel %vm729, 4294967295, 65535
      %v732 = vsel %vm730, %v731, 0
      %v734 = vand.u32 %v630, %v732
      %736 = vmatprep.subr.bf16.mxu0 0
      %737 = vmatpush1.bf16.msra.mxu0 %v629
      %738 = vmatprep.subr.bf16.mxu0 0
      %739 = vmatpush1.bf16.msra.mxu0 %v734
      %740 = vmatprep.subr.bf16.mxu0 0
      %741 = vmatpush1.bf16.msra.mxu0 0
      %742 = vmatprep.subr.bf16.mxu0 0
      %743 = vmatpush1.bf16.msra.mxu0 0
      %744 = vmatprep.subr.bf16.mxu0 0
      %745 = vmatpush1.bf16.msra.mxu0 0
      %746 = vmatprep.subr.bf16.mxu0 0
      %747 = vmatpush1.bf16.msra.mxu0 0
      %748 = vmatprep.subr.bf16.mxu0 0
      %749 = vmatpush1.bf16.msra.mxu0 0
      %750 = vmatprep.subr.bf16.mxu0 0
      %751 = vmatpush1.bf16.msra.mxu0 0
      %752 = vmatprep.subr.bf16.mxu0 0
      %753 = vmatpush1.bf16.msra.mxu0 0
      %754 = vmatprep.subr.bf16.mxu0 0
      %755 = vmatpush1.bf16.msra.mxu0 0
      %756 = vmatprep.subr.bf16.mxu0 0
      %757 = vmatpush1.bf16.msra.mxu0 0
      %758 = vmatprep.subr.bf16.mxu0 0
      %759 = vmatpush1.bf16.msra.mxu0 0
      %760 = vmatprep.subr.bf16.mxu0 0
      %761 = vmatpush1.bf16.msra.mxu0 0
      %762 = vmatprep.subr.bf16.mxu0 0
      %763 = vmatpush1.bf16.msra.mxu0 0
      %764 = vmatprep.subr.bf16.mxu0 0
      %765 = vmatpush1.bf16.msra.mxu0 0
      %766 = vmatprep.subr.bf16.mxu0 0
      %767 = vmatpush1.bf16.msra.mxu0 0
      %768 = vmatprep.mubr.bf16.mxu0 0
      %769 = vmatmul.mubr.bf16.gmra.mrb[0].mxu0 %v634
      %v770 = vpop.f32.mrb[0].mxu0
      %v771 = vadd.f32 0.0, %v770
      %v772 = vpop.f32.mrb[0].mxu0
      %v773 = vpop.f32.mrb[0].mxu0
      %v774 = vadd.f32 0.0, %v773
      %v775 = vpop.f32.mrb[0].mxu0
      %776 = vmatprep.mubr.bf16.mxu0 0
      %777 = vmatmul.mubr.bf16.gmra.mrb[0].mxu0 %v637
      %v778 = vpop.f32.mrb[0].mxu0
      %v779 = vadd.f32 0.0, %v778
      %v780 = vpop.f32.mrb[0].mxu0
      %v781 = vpop.f32.mrb[0].mxu0
      %v782 = vadd.f32 0.0, %v781
      %v783 = vpop.f32.mrb[0].mxu0
      %784 = vmatprep.mubr.bf16.mxu0 0
      %785 = vmatmul.mubr.bf16.gmra.mrb[0].mxu0 %v640
      %v786 = vpop.f32.mrb[0].mxu0
      %v787 = vadd.f32 0.0, %v786
      %v788 = vpop.f32.mrb[0].mxu0
      %v789 = vpop.f32.mrb[0].mxu0
      %v790 = vadd.f32 0.0, %v789
      %v791 = vpop.f32.mrb[0].mxu0
      %792 = vmatprep.mubr.bf16.mxu0 0
      %793 = vmatmul.mubr.bf16.gmra.mrb[0].mxu0 %v643
      %v794 = vpop.f32.mrb[0].mxu0
      %v795 = vadd.f32 0.0, %v794
      %v796 = vpop.f32.mrb[0].mxu0
      %v797 = vpop.f32.mrb[0].mxu0
      %v798 = vadd.f32 0.0, %v797
      %v799 = vpop.f32.mrb[0].mxu0
      %800 = vmatprep.mubr.bf16.mxu0 0
      %801 = vmatmul.mubr.bf16.gmra.mrb[0].mxu0 %v646
      %v802 = vpop.f32.mrb[0].mxu0
      %v803 = vadd.f32 0.0, %v802
      %v804 = vpop.f32.mrb[0].mxu0
      %v805 = vpop.f32.mrb[0].mxu0
      %v806 = vadd.f32 0.0, %v805
      %v807 = vpop.f32.mrb[0].mxu0
      %808 = vmatprep.mubr.bf16.mxu0 0
      %809 = vmatmul.mubr.bf16.gmra.mrb[0].mxu0 %v649
      %v810 = vpop.f32.mrb[0].mxu0
      %v811 = vadd.f32 0.0, %v810
      %v812 = vpop.f32.mrb[0].mxu0
      %v813 = vpop.f32.mrb[0].mxu0
      %v814 = vadd.f32 0.0, %v813
      %v815 = vpop.f32.mrb[0].mxu0
      %816 = vmatprep.mubr.bf16.mxu0 0
      %817 = vmatmul.mubr.bf16.gmra.mrb[0].mxu0 %v652
      %v818 = vpop.f32.mrb[0].mxu0
      %v819 = vadd.f32 0.0, %v818
      %v820 = vpop.f32.mrb[0].mxu0
      %v821 = vpop.f32.mrb[0].mxu0
      %v822 = vadd.f32 0.0, %v821
      %v823 = vpop.f32.mrb[0].mxu0
      %824 = vmatprep.mubr.bf16.mxu0 0
      %825 = vmatmul.mubr.bf16.gmra.mrb[0].mxu0 %v655
      %v826 = vpop.f32.mrb[0].mxu0
      %v827 = vadd.f32 0.0, %v826
      %v828 = vpop.f32.mrb[0].mxu0
      %v829 = vpop.f32.mrb[0].mxu0
      %v830 = vadd.f32 0.0, %v829
      %v831 = vpop.f32.mrb[0].mxu0
      %832 = vmatprep.mubr.bf16.mxu0 0
      %833 = vmatmul.mubr.bf16.gmra.mrb[0].mxu0 %v658
      %v834 = vpop.f32.mrb[0].mxu0
      %v835 = vadd.f32 0.0, %v834
      %v836 = vpop.f32.mrb[0].mxu0
      %v837 = vpop.f32.mrb[0].mxu0
      %v838 = vadd.f32 0.0, %v837
      %v839 = vpop.f32.mrb[0].mxu0
      %840 = vmatprep.mubr.bf16.mxu0 0
      %841 = vmatmul.mubr.bf16.gmra.mrb[0].mxu0 %v661
      %v842 = vpop.f32.mrb[0].mxu0
      %v843 = vadd.f32 0.0, %v842
      %v844 = vpop.f32.mrb[0].mxu0
      %v845 = vpop.f32.mrb[0].mxu0
      %v846 = vadd.f32 0.0, %v845
      %v847 = vpop.f32.mrb[0].mxu0
      %848 = vmatprep.mubr.bf16.mxu0 0
      %849 = vmatmul.mubr.bf16.gmra.mrb[0].mxu0 %v664
      %v850 = vpop.f32.mrb[0].mxu0
      %v851 = vadd.f32 0.0, %v850
      %v852 = vpop.f32.mrb[0].mxu0
      %v853 = vpop.f32.mrb[0].mxu0
      %v854 = vadd.f32 0.0, %v853
      %v855 = vpop.f32.mrb[0].mxu0
      %856 = vmatprep.mubr.bf16.mxu0 0
      %857 = vmatmul.mubr.bf16.gmra.mrb[0].mxu0 %v667
      %v858 = vpop.f32.mrb[0].mxu0
      %v859 = vadd.f32 0.0, %v858
      %v860 = vpop.f32.mrb[0].mxu0
      %v861 = vpop.f32.mrb[0].mxu0
      %v862 = vadd.f32 0.0, %v861
      %v863 = vpop.f32.mrb[0].mxu0
      %864 = vmatprep.mubr.bf16.mxu0 0
      %865 = vmatmul.mubr.bf16.gmra.mrb[0].mxu0 %v670
      %v866 = vpop.f32.mrb[0].mxu0
      %v867 = vadd.f32 0.0, %v866
      %v868 = vpop.f32.mrb[0].mxu0
      %v869 = vpop.f32.mrb[0].mxu0
      %v870 = vadd.f32 0.0, %v869
      %v871 = vpop.f32.mrb[0].mxu0
      %872 = vmatprep.mubr.bf16.mxu0 0
      %873 = vmatmul.mubr.bf16.gmra.mrb[0].mxu0 %v673
      %v874 = vpop.f32.mrb[0].mxu0
      %v875 = vadd.f32 0.0, %v874
      %v876 = vpop.f32.mrb[0].mxu0
      %v877 = vpop.f32.mrb[0].mxu0
      %v878 = vadd.f32 0.0, %v877
      %v879 = vpop.f32.mrb[0].mxu0
      %880 = vmatprep.mubr.bf16.mxu0 0
      %881 = vmatmul.mubr.bf16.gmra.mrb[0].mxu0 %v676
      %v882 = vpop.f32.mrb[0].mxu0
      %v883 = vadd.f32 0.0, %v882
      %v884 = vpop.f32.mrb[0].mxu0
      %v885 = vpop.f32.mrb[0].mxu0
      %v886 = vadd.f32 0.0, %v885
      %v887 = vpop.f32.mrb[0].mxu0
      %888 = vmatprep.mubr.bf16.mxu0 0
      %889 = vmatmul.mubr.bf16.gmra.mrb[0].mxu0 %v679
      %v890 = vpop.f32.mrb[0].mxu0
      %v891 = vadd.f32 0.0, %v890
      %v892 = vpop.f32.mrb[0].mxu0
      %v893 = vpop.f32.mrb[0].mxu0
      %v894 = vadd.f32 0.0, %v893
      %v895 = vpop.f32.mrb[0].mxu0
      %896 = vmatprep.mubr.bf16.mxu0 0
      %897 = vmatmul.mubr.bf16.gmra.mrb[0].mxu0 %v682
      %v898 = vpop.f32.mrb[0].mxu0
      %v899 = vadd.f32 0.0, %v898
      %v900 = vpop.f32.mrb[0].mxu0
      %v901 = vpop.f32.mrb[0].mxu0
      %v902 = vadd.f32 0.0, %v901
      %v903 = vpop.f32.mrb[0].mxu0
      %904 = vmatprep.mubr.bf16.mxu0 0
      %905 = vmatmul.mubr.bf16.gmra.mrb[0].mxu0 %v685
      %v906 = vpop.f32.mrb[0].mxu0
      %v907 = vadd.f32 0.0, %v906
      %v908 = vpop.f32.mrb[0].mxu0
      %v909 = vpop.f32.mrb[0].mxu0
      %v910 = vadd.f32 0.0, %v909
      %v911 = vpop.f32.mrb[0].mxu0
      %912 = vmatprep.mubr.bf16.mxu0 0
      %913 = vmatmul.mubr.bf16.gmra.mrb[0].mxu0 %v688
      %v914 = vpop.f32.mrb[0].mxu0
      %v915 = vadd.f32 0.0, %v914
      %v916 = vpop.f32.mrb[0].mxu0
      %v917 = vpop.f32.mrb[0].mxu0
      %v918 = vadd.f32 0.0, %v917
      %v919 = vpop.f32.mrb[0].mxu0
      %920 = vmatprep.mubr.bf16.mxu0 0
      %921 = vmatmul.mubr.bf16.gmra.mrb[0].mxu0 %v691
      %v922 = vpop.f32.mrb[0].mxu0
      %v923 = vadd.f32 0.0, %v922
      %v924 = vpop.f32.mrb[0].mxu0
      %v925 = vpop.f32.mrb[0].mxu0
      %v926 = vadd.f32 0.0, %v925
      %v927 = vpop.f32.mrb[0].mxu0
      %928 = vmatprep.mubr.bf16.mxu0 0
      %929 = vmatmul.mubr.bf16.gmra.mrb[0].mxu0 %v694
      %v930 = vpop.f32.mrb[0].mxu0
      %v931 = vadd.f32 0.0, %v930
      %v932 = vpop.f32.mrb[0].mxu0
      %v933 = vpop.f32.mrb[0].mxu0
      %v934 = vadd.f32 0.0, %v933
      %v935 = vpop.f32.mrb[0].mxu0
      %936 = vmatprep.mubr.bf16.mxu0 0
      %937 = vmatmul.mubr.bf16.gmra.mrb[0].mxu0 %v697
      %v938 = vpop.f32.mrb[0].mxu0
      %v939 = vadd.f32 0.0, %v938
      %v940 = vpop.f32.mrb[0].mxu0
      %v941 = vpop.f32.mrb[0].mxu0
      %v942 = vadd.f32 0.0, %v941
      %v943 = vpop.f32.mrb[0].mxu0
      %944 = vmatprep.mubr.bf16.mxu0 0
      %945 = vmatmul.mubr.bf16.gmra.mrb[0].mxu0 %v700
      %v946 = vpop.f32.mrb[0].mxu0
      %v947 = vadd.f32 0.0, %v946
      %v948 = vpop.f32.mrb[0].mxu0
      %v949 = vpop.f32.mrb[0].mxu0
      %v950 = vadd.f32 0.0, %v949
      %v951 = vpop.f32.mrb[0].mxu0
      %952 = vmatprep.mubr.bf16.mxu0 0
      %953 = vmatmul.mubr.bf16.gmra.mrb[0].mxu0 %v703
      %v954 = vpop.f32.mrb[0].mxu0
      %v955 = vadd.f32 0.0, %v954
      %v956 = vpop.f32.mrb[0].mxu0
      %v957 = vpop.f32.mrb[0].mxu0
      %v958 = vadd.f32 0.0, %v957
      %v959 = vpop.f32.mrb[0].mxu0
      %960 = vmatprep.mubr.bf16.mxu0 0
      %961 = vmatmul.mubr.bf16.gmra.mrb[0].mxu0 %v706
      %v962 = vpop.f32.mrb[0].mxu0
      %v963 = vadd.f32 0.0, %v962
      %v964 = vpop.f32.mrb[0].mxu0
      %v965 = vpop.f32.mrb[0].mxu0
      %v966 = vadd.f32 0.0, %v965
      %v967 = vpop.f32.mrb[0].mxu0
      %968 = vmatprep.mubr.bf16.mxu0 0
      %969 = vmatmul.mubr.bf16.gmra.mrb[0].mxu0 %v709
      %v970 = vpop.f32.mrb[0].mxu0
      %v971 = vadd.f32 0.0, %v970
      %v972 = vpop.f32.mrb[0].mxu0
      %v973 = vpop.f32.mrb[0].mxu0
      %v974 = vadd.f32 0.0, %v973
      %v975 = vpop.f32.mrb[0].mxu0
      %976 = vmatprep.mubr.bf16.mxu0 0
      %977 = vmatmul.mubr.bf16.gmra.mrb[0].mxu0 %v712
      %v978 = vpop.f32.mrb[0].mxu0
      %v979 = vadd.f32 0.0, %v978
      %v980 = vpop.f32.mrb[0].mxu0
      %v981 = vpop.f32.mrb[0].mxu0
      %v982 = vadd.f32 0.0, %v981
      %v983 = vpop.f32.mrb[0].mxu0
      %984 = vmatprep.mubr.bf16.mxu0 0
      %985 = vmatmul.mubr.bf16.gmra.mrb[0].mxu0 %v715
      %v986 = vpop.f32.mrb[0].mxu0
      %v987 = vadd.f32 0.0, %v986
      %v988 = vpop.f32.mrb[0].mxu0
      %v989 = vpop.f32.mrb[0].mxu0
      %v990 = vadd.f32 0.0, %v989
      %v991 = vpop.f32.mrb[0].mxu0
      %992 = vmatprep.mubr.bf16.mxu0 0
      %993 = vmatmul.mubr.bf16.gmra.mrb[0].mxu0 %v718
      %v994 = vpop.f32.mrb[0].mxu0
      %v995 = vadd.f32 0.0, %v994
      %v996 = vpop.f32.mrb[0].mxu0
      %v997 = vpop.f32.mrb[0].mxu0
      %v998 = vadd.f32 0.0, %v997
      %v999 = vpop.f32.mrb[0].mxu0
      %1000 = vmatprep.mubr.bf16.mxu0 0
      %1001 = vmatmul.mubr.bf16.gmra.mrb[0].mxu0 %v721
      %v1002 = vpop.f32.mrb[0].mxu0
      %v1003 = vadd.f32 0.0, %v1002
      %v1004 = vpop.f32.mrb[0].mxu0
      %v1005 = vpop.f32.mrb[0].mxu0
      %v1006 = vadd.f32 0.0, %v1005
      %v1007 = vpop.f32.mrb[0].mxu0
      %1008 = vmatprep.mubr.bf16.mxu0 0
      %1009 = vmatmul.mubr.bf16.gmra.mrb[0].mxu0 %v724
      %v1010 = vpop.f32.mrb[0].mxu0
      %v1011 = vadd.f32 0.0, %v1010
      %v1012 = vpop.f32.mrb[0].mxu0
      %v1013 = vpop.f32.mrb[0].mxu0
      %v1014 = vadd.f32 0.0, %v1013
      %v1015 = vpop.f32.mrb[0].mxu0
      %1016 = vmatprep.mubr.bf16.mxu0 0
      %1017 = vmatmul.mubr.bf16.gmra.mrb[0].mxu0 %v727
      %v1018 = vpop.f32.mrb[0].mxu0
      %v1019 = vadd.f32 0.0, %v1018
      %v1020 = vpop.f32.mrb[0].mxu0
      %v1021 = vpop.f32.mrb[0].mxu0
      %v1022 = vadd.f32 0.0, %v1021
      %v1023 = vpop.f32.mrb[0].mxu0
      %1024 = vdwg.mxu0
      %v1025 = vadd.f32 %v329, %v771
      %v1026 = vadd.f32 %v330, %v774
      %v1027 = vadd.f32 %v331, %v779
      %v1028 = vadd.f32 %v332, %v782
      %v1029 = vadd.f32 %v333, %v787
      %v1030 = vadd.f32 %v334, %v790
      %v1031 = vadd.f32 %v335, %v795
      %v1032 = vadd.f32 %v336, %v798
      %v1033 = vadd.f32 %v337, %v803
      %v1034 = vadd.f32 %v338, %v806
      %v1035 = vadd.f32 %v339, %v811
      %v1036 = vadd.f32 %v340, %v814
      %v1037 = vadd.f32 %v341, %v819
      %v1038 = vadd.f32 %v342, %v822
      %v1039 = vadd.f32 %v343, %v827
      %v1040 = vadd.f32 %v344, %v830
      %v1041 = vadd.f32 %v345, %v835
      %v1042 = vadd.f32 %v346, %v838
      %v1043 = vadd.f32 %v347, %v843
      %v1044 = vadd.f32 %v348, %v846
      %v1045 = vadd.f32 %v349, %v851
      %v1046 = vadd.f32 %v350, %v854
      %v1047 = vadd.f32 %v351, %v859
      %v1048 = vadd.f32 %v352, %v862
      %v1049 = vadd.f32 %v353, %v867
      %v1050 = vadd.f32 %v354, %v870
      %v1051 = vadd.f32 %v355, %v875
      %v1052 = vadd.f32 %v356, %v878
      %v1053 = vadd.f32 %v357, %v883
      %v1054 = vadd.f32 %v358, %v886
      %v1055 = vadd.f32 %v359, %v891
      %v1056 = vadd.f32 %v360, %v894
      %v1057 = vadd.f32 %v361, %v899
      %v1058 = vadd.f32 %v362, %v902
      %v1059 = vadd.f32 %v363, %v907
      %v1060 = vadd.f32 %v364, %v910
      %v1061 = vadd.f32 %v365, %v915
      %v1062 = vadd.f32 %v366, %v918
      %v1063 = vadd.f32 %v367, %v923
      %v1064 = vadd.f32 %v368, %v926
      %v1065 = vadd.f32 %v369, %v931
      %v1066 = vadd.f32 %v370, %v934
      %v1067 = vadd.f32 %v371, %v939
      %v1068 = vadd.f32 %v372, %v942
      %v1069 = vadd.f32 %v373, %v947
      %v1070 = vadd.f32 %v374, %v950
      %v1071 = vadd.f32 %v375, %v955
      %v1072 = vadd.f32 %v376, %v958
      %v1073 = vadd.f32 %v377, %v963
      %v1074 = vadd.f32 %v378, %v966
      %v1075 = vadd.f32 %v379, %v971
      %v1076 = vadd.f32 %v380, %v974
      %v1077 = vadd.f32 %v381, %v979
      %v1078 = vadd.f32 %v382, %v982
      %v1079 = vadd.f32 %v383, %v987
      %v1080 = vadd.f32 %v384, %v990
      %v1081 = vadd.f32 %v385, %v995
      %v1082 = vadd.f32 %v386, %v998
      %v1083 = vadd.f32 %v387, %v1003
      %v1084 = vadd.f32 %v388, %v1006
      %v1085 = vadd.f32 %v389, %v1011
      %v1086 = vadd.f32 %v390, %v1014
      %v1087 = vadd.f32 %v391, %v1019
      %v1088 = vadd.f32 %v392, %v1022
      %vm1089 = vcmask 523264
      %1090 = vst.msk [vmem:[#allocation2] sm:$0xff] %vm1089, %v1025
      %1091 = vst.msk [vmem:[#allocation2 + $0x8] sm:$0xff] %vm1089, %v1026
      %1092 = vst.msk [vmem:[#allocation2 + $0x10] sm:$0xff] %vm1089, %v1027
      %1093 = vst.msk [vmem:[#allocation2 + $0x18] sm:$0xff] %vm1089, %v1028
      %1094 = vst.msk [vmem:[#allocation2 + $0x20] sm:$0xff] %vm1089, %v1029
      %1095 = vst.msk [vmem:[#allocation2 + $0x28] sm:$0xff] %vm1089, %v1030
      %1096 = vst.msk [vmem:[#allocation2 + $0x30] sm:$0xff] %vm1089, %v1031
      %1097 = vst.msk [vmem:[#allocation2 + $0x38] sm:$0xff] %vm1089, %v1032
      %1098 = vst.msk [vmem:[#allocation2 + $0x40] sm:$0xff] %vm1089, %v1033
      %1099 = vst.msk [vmem:[#allocation2 + $0x48] sm:$0xff] %vm1089, %v1034
      %1100 = vst.msk [vmem:[#allocation2 + $0x50] sm:$0xff] %vm1089, %v1035
      %1101 = vst.msk [vmem:[#allocation2 + $0x58] sm:$0xff] %vm1089, %v1036
      %1102 = vst.msk [vmem:[#allocation2 + $0x60] sm:$0xff] %vm1089, %v1037
      %1103 = vst.msk [vmem:[#allocation2 + $0x68] sm:$0xff] %vm1089, %v1038
      %1104 = vst.msk [vmem:[#allocation2 + $0x70] sm:$0xff] %vm1089, %v1039
      %1105 = vst.msk [vmem:[#allocation2 + $0x78] sm:$0xff] %vm1089, %v1040
      %1106 = vst.msk [vmem:[#allocation2 + $0x80] sm:$0xff] %vm1089, %v1041
      %1107 = vst.msk [vmem:[#allocation2 + $0x88] sm:$0xff] %vm1089, %v1042
      %1108 = vst.msk [vmem:[#allocation2 + $0x90] sm:$0xff] %vm1089, %v1043
      %1109 = vst.msk [vmem:[#allocation2 + $0x98] sm:$0xff] %vm1089, %v1044
      %1110 = vst.msk [vmem:[#allocation2 + $0xa0] sm:$0xff] %vm1089, %v1045
      %1111 = vst.msk [vmem:[#allocation2 + $0xa8] sm:$0xff] %vm1089, %v1046
      %1112 = vst.msk [vmem:[#allocation2 + $0xb0] sm:$0xff] %vm1089, %v1047
      %1113 = vst.msk [vmem:[#allocation2 + $0xb8] sm:$0xff] %vm1089, %v1048
      %1114 = vst.msk [vmem:[#allocation2 + $0xc0] sm:$0xff] %vm1089, %v1049
      %1115 = vst.msk [vmem:[#allocation2 + $0xc8] sm:$0xff] %vm1089, %v1050
      %1116 = vst.msk [vmem:[#allocation2 + $0xd0] sm:$0xff] %vm1089, %v1051
      %1117 = vst.msk [vmem:[#allocation2 + $0xd8] sm:$0xff] %vm1089, %v1052
      %1118 = vst.msk [vmem:[#allocation2 + $0xe0] sm:$0xff] %vm1089, %v1053
      %1119 = vst.msk [vmem:[#allocation2 + $0xe8] sm:$0xff] %vm1089, %v1054
      %1120 = vst.msk [vmem:[#allocation2 + $0xf0] sm:$0xff] %vm1089, %v1055
      %1121 = vst.msk [vmem:[#allocation2 + $0xf8] sm:$0xff] %vm1089, %v1056
      %1122 = vst.msk [vmem:[#allocation2 + $0x100] sm:$0xff] %vm1089, %v1057
      %1123 = vst.msk [vmem:[#allocation2 + $0x108] sm:$0xff] %vm1089, %v1058
      %1124 = vst.msk [vmem:[#allocation2 + $0x110] sm:$0xff] %vm1089, %v1059
      %1125 = vst.msk [vmem:[#allocation2 + $0x118] sm:$0xff] %vm1089, %v1060
      %1126 = vst.msk [vmem:[#allocation2 + $0x120] sm:$0xff] %vm1089, %v1061
      %1127 = vst.msk [vmem:[#allocation2 + $0x128] sm:$0xff] %vm1089, %v1062
      %1128 = vst.msk [vmem:[#allocation2 + $0x130] sm:$0xff] %vm1089, %v1063
      %1129 = vst.msk [vmem:[#allocation2 + $0x138] sm:$0xff] %vm1089, %v1064
      %1130 = vst.msk [vmem:[#allocation2 + $0x140] sm:$0xff] %vm1089, %v1065
      %1131 = vst.msk [vmem:[#allocation2 + $0x148] sm:$0xff] %vm1089, %v1066
      %1132 = vst.msk [vmem:[#allocation2 + $0x150] sm:$0xff] %vm1089, %v1067
      %1133 = vst.msk [vmem:[#allocation2 + $0x158] sm:$0xff] %vm1089, %v1068
      %1134 = vst.msk [vmem:[#allocation2 + $0x160] sm:$0xff] %vm1089, %v1069
      %1135 = vst.msk [vmem:[#allocation2 + $0x168] sm:$0xff] %vm1089, %v1070
      %1136 = vst.msk [vmem:[#allocation2 + $0x170] sm:$0xff] %vm1089, %v1071
      %1137 = vst.msk [vmem:[#allocation2 + $0x178] sm:$0xff] %vm1089, %v1072
      %1138 = vst.msk [vmem:[#allocation2 + $0x180] sm:$0xff] %vm1089, %v1073
      %1139 = vst.msk [vmem:[#allocation2 + $0x188] sm:$0xff] %vm1089, %v1074
      %1140 = vst.msk [vmem:[#allocation2 + $0x190] sm:$0xff] %vm1089, %v1075
      %1141 = vst.msk [vmem:[#allocation2 + $0x198] sm:$0xff] %vm1089, %v1076
      %1142 = vst.msk [vmem:[#allocation2 + $0x1a0] sm:$0xff] %vm1089, %v1077
      %1143 = vst.msk [vmem:[#allocation2 + $0x1a8] sm:$0xff] %vm1089, %v1078
      %1144 = vst.msk [vmem:[#allocation2 + $0x1b0] sm:$0xff] %vm1089, %v1079
      %1145 = vst.msk [vmem:[#allocation2 + $0x1b8] sm:$0xff] %vm1089, %v1080
      %1146 = vst.msk [vmem:[#allocation2 + $0x1c0] sm:$0xff] %vm1089, %v1081
      %1147 = vst.msk [vmem:[#allocation2 + $0x1c8] sm:$0xff] %vm1089, %v1082
      %1148 = vst.msk [vmem:[#allocation2 + $0x1d0] sm:$0xff] %vm1089, %v1083
      %1149 = vst.msk [vmem:[#allocation2 + $0x1d8] sm:$0xff] %vm1089, %v1084
      %1150 = vst.msk [vmem:[#allocation2 + $0x1e0] sm:$0xff] %vm1089, %v1085
      %1151 = vst.msk [vmem:[#allocation2 + $0x1e8] sm:$0xff] %vm1089, %v1086
      %1152 = vst.msk [vmem:[#allocation2 + $0x1f0] sm:$0xff] %vm1089, %v1087
      %1153 = vst.msk [vmem:[#allocation2 + $0x1f8] sm:$0xff] %vm1089, %v1088
      // Predicated region
      $region37: #{tpu_custom_call.1} parent=31 // pred_check
        %p1154 = pneg %p260
      $region38: #{tpu_custom_call.1} parent=31 // pred_check_branch
        %1156 = sbr.rel (%p1154) target = $region40
      $region39: #{tpu_custom_call.1} parent=31 // pred_region
        %v1157 = vld [vmem:[#allocation2] sm:$0xff]
        %v1158 = vld [vmem:[#allocation2 + $0x8] sm:$0xff]
        %v1159 = vld [vmem:[#allocation2 + $0x10] sm:$0xff]
        %v1160 = vld [vmem:[#allocation2 + $0x18] sm:$0xff]
        %v1161 = vld [vmem:[#allocation2 + $0x20] sm:$0xff]
        %v1162 = vld [vmem:[#allocation2 + $0x28] sm:$0xff]
        %v1163 = vld [vmem:[#allocation2 + $0x30] sm:$0xff]
        %v1164 = vld [vmem:[#allocation2 + $0x38] sm:$0xff]
        %v1165 = vld [vmem:[#allocation2 + $0x40] sm:$0xff]
        %v1166 = vld [vmem:[#allocation2 + $0x48] sm:$0xff]
        %v1167 = vld [vmem:[#allocation2 + $0x50] sm:$0xff]
        %v1168 = vld [vmem:[#allocation2 + $0x58] sm:$0xff]
        %v1169 = vld [vmem:[#allocation2 + $0x60] sm:$0xff]
        %v1170 = vld [vmem:[#allocation2 + $0x68] sm:$0xff]
        %v1171 = vld [vmem:[#allocation2 + $0x70] sm:$0xff]
        %v1172 = vld [vmem:[#allocation2 + $0x78] sm:$0xff]
        %v1173 = vld [vmem:[#allocation2 + $0x80] sm:$0xff]
        %v1174 = vld [vmem:[#allocation2 + $0x88] sm:$0xff]
        %v1175 = vld [vmem:[#allocation2 + $0x90] sm:$0xff]
        %v1176 = vld [vmem:[#allocation2 + $0x98] sm:$0xff]
        %v1177 = vld [vmem:[#allocation2 + $0xa0] sm:$0xff]
        %v1178 = vld [vmem:[#allocation2 + $0xa8] sm:$0xff]
        %v1179 = vld [vmem:[#allocation2 + $0xb0] sm:$0xff]
        %v1180 = vld [vmem:[#allocation2 + $0xb8] sm:$0xff]
        %v1181 = vld [vmem:[#allocation2 + $0xc0] sm:$0xff]
        %v1182 = vld [vmem:[#allocation2 + $0xc8] sm:$0xff]
        %v1183 = vld [vmem:[#allocation2 + $0xd0] sm:$0xff]
        %v1184 = vld [vmem:[#allocation2 + $0xd8] sm:$0xff]
        %v1185 = vld [vmem:[#allocation2 + $0xe0] sm:$0xff]
        %v1186 = vld [vmem:[#allocation2 + $0xe8] sm:$0xff]
        %v1187 = vld [vmem:[#allocation2 + $0xf0] sm:$0xff]
        %v1188 = vld [vmem:[#allocation2 + $0xf8] sm:$0xff]
        %v1189 = vld [vmem:[#allocation2 + $0x100] sm:$0xff]
        %v1190 = vld [vmem:[#allocation2 + $0x108] sm:$0xff]
        %v1191 = vld [vmem:[#allocation2 + $0x110] sm:$0xff]
        %v1192 = vld [vmem:[#allocation2 + $0x118] sm:$0xff]
        %v1193 = vld [vmem:[#allocation2 + $0x120] sm:$0xff]
        %v1194 = vld [vmem:[#allocation2 + $0x128] sm:$0xff]
        %v1195 = vld [vmem:[#allocation2 + $0x130] sm:$0xff]
        %v1196 = vld [vmem:[#allocation2 + $0x138] sm:$0xff]
        %v1197 = vld [vmem:[#allocation2 + $0x140] sm:$0xff]
        %v1198 = vld [vmem:[#allocation2 + $0x148] sm:$0xff]
        %v1199 = vld [vmem:[#allocation2 + $0x150] sm:$0xff]
        %v1200 = vld [vmem:[#allocation2 + $0x158] sm:$0xff]
        %v1201 = vld [vmem:[#allocation2 + $0x160] sm:$0xff]
        %v1202 = vld [vmem:[#allocation2 + $0x168] sm:$0xff]
        %v1203 = vld [vmem:[#allocation2 + $0x170] sm:$0xff]
        %v1204 = vld [vmem:[#allocation2 + $0x178] sm:$0xff]
        %v1205 = vld [vmem:[#allocation2 + $0x180] sm:$0xff]
        %v1206 = vld [vmem:[#allocation2 + $0x188] sm:$0xff]
        %v1207 = vld [vmem:[#allocation2 + $0x190] sm:$0xff]
        %v1208 = vld [vmem:[#allocation2 + $0x198] sm:$0xff]
        %v1209 = vld [vmem:[#allocation2 + $0x1a0] sm:$0xff]
        %v1210 = vld [vmem:[#allocation2 + $0x1a8] sm:$0xff]
        %v1211 = vld [vmem:[#allocation2 + $0x1b0] sm:$0xff]
        %v1212 = vld [vmem:[#allocation2 + $0x1b8] sm:$0xff]
        %v1213 = vld [vmem:[#allocation2 + $0x1c0] sm:$0xff]
        %v1214 = vld [vmem:[#allocation2 + $0x1c8] sm:$0xff]
        %v1215 = vld [vmem:[#allocation2 + $0x1d0] sm:$0xff]
        %v1216 = vld [vmem:[#allocation2 + $0x1d8] sm:$0xff]
        %v1217 = vld [vmem:[#allocation2 + $0x1e0] sm:$0xff]
        %v1218 = vld [vmem:[#allocation2 + $0x1e8] sm:$0xff]
        %v1219 = vld [vmem:[#allocation2 + $0x1f0] sm:$0xff]
        %v1220 = vld [vmem:[#allocation2 + $0x1f8] sm:$0xff]
        %v1221 = vld [vmem:[%s249] sm:$0x1]
        %v1223 = vlaneseq
        %v1224 = vshrl.u32 %v1223, 7
        %v1225 = vsub.s32 0, %v1224
        %v1226 = vrot.slane %v1221, %v1225
        %v1228 = vadd.f32 %v1157, %v1226
        %v1229 = vadd.f32 %v1158, %v1226
        %v1230 = vadd.f32 %v1159, %v1226
        %v1231 = vadd.f32 %v1160, %v1226
        %v1232 = vadd.f32 %v1161, %v1226
        %v1233 = vadd.f32 %v1162, %v1226
        %v1234 = vadd.f32 %v1163, %v1226
        %v1235 = vadd.f32 %v1164, %v1226
        %v1236 = vadd.f32 %v1165, %v1226
        %v1237 = vadd.f32 %v1166, %v1226
        %v1238 = vadd.f32 %v1167, %v1226
        %v1239 = vadd.f32 %v1168, %v1226
        %v1240 = vadd.f32 %v1169, %v1226
        %v1241 = vadd.f32 %v1170, %v1226
        %v1242 = vadd.f32 %v1171, %v1226
        %v1243 = vadd.f32 %v1172, %v1226
        %v1244 = vadd.f32 %v1173, %v1226
        %v1245 = vadd.f32 %v1174, %v1226
        %v1246 = vadd.f32 %v1175, %v1226
        %v1247 = vadd.f32 %v1176, %v1226
        %v1248 = vadd.f32 %v1177, %v1226
        %v1249 = vadd.f32 %v1178, %v1226
        %v1250 = vadd.f32 %v1179, %v1226
        %v1251 = vadd.f32 %v1180, %v1226
        %v1252 = vadd.f32 %v1181, %v1226
        %v1253 = vadd.f32 %v1182, %v1226
        %v1254 = vadd.f32 %v1183, %v1226
        %v1255 = vadd.f32 %v1184, %v1226
        %v1256 = vadd.f32 %v1185, %v1226
        %v1257 = vadd.f32 %v1186, %v1226
        %v1258 = vadd.f32 %v1187, %v1226
        %v1259 = vadd.f32 %v1188, %v1226
        %v1260 = vadd.f32 %v1189, %v1226
        %v1261 = vadd.f32 %v1190, %v1226
        %v1262 = vadd.f32 %v1191, %v1226
        %v1263 = vadd.f32 %v1192, %v1226
        %v1264 = vadd.f32 %v1193, %v1226
        %v1265 = vadd.f32 %v1194, %v1226
        %v1266 = vadd.f32 %v1195, %v1226
        %v1267 = vadd.f32 %v1196, %v1226
        %v1268 = vadd.f32 %v1197, %v1226
        %v1269 = vadd.f32 %v1198, %v1226
        %v1270 = vadd.f32 %v1199, %v1226
        %v1271 = vadd.f32 %v1200, %v1226
        %v1272 = vadd.f32 %v1201, %v1226
        %v1273 = vadd.f32 %v1202, %v1226
        %v1274 = vadd.f32 %v1203, %v1226
        %v1275 = vadd.f32 %v1204, %v1226
        %v1276 = vadd.f32 %v1205, %v1226
        %v1277 = vadd.f32 %v1206, %v1226
        %v1278 = vadd.f32 %v1207, %v1226
        %v1279 = vadd.f32 %v1208, %v1226
        %v1280 = vadd.f32 %v1209, %v1226
        %v1281 = vadd.f32 %v1210, %v1226
        %v1282 = vadd.f32 %v1211, %v1226
        %v1283 = vadd.f32 %v1212, %v1226
        %v1284 = vadd.f32 %v1213, %v1226
        %v1285 = vadd.f32 %v1214, %v1226
        %v1286 = vadd.f32 %v1215, %v1226
        %v1287 = vadd.f32 %v1216, %v1226
        %v1288 = vadd.f32 %v1217, %v1226
        %v1289 = vadd.f32 %v1218, %v1226
        %v1290 = vadd.f32 %v1219, %v1226
        %v1291 = vadd.f32 %v1220, %v1226
        %v1292 = vmax.f32 %v1228, 0.0
        %v1293 = vmax.f32 %v1229, 0.0
        %v1294 = vmax.f32 %v1230, 0.0
        %v1295 = vmax.f32 %v1231, 0.0
        %v1296 = vmax.f32 %v1232, 0.0
        %v1297 = vmax.f32 %v1233, 0.0
        %v1298 = vmax.f32 %v1234, 0.0
        %v1299 = vmax.f32 %v1235, 0.0
        %v1300 = vmax.f32 %v1236, 0.0
        %v1301 = vmax.f32 %v1237, 0.0
        %v1302 = vmax.f32 %v1238, 0.0
        %v1303 = vmax.f32 %v1239, 0.0
        %v1304 = vmax.f32 %v1240, 0.0
        %v1305 = vmax.f32 %v1241, 0.0
        %v1306 = vmax.f32 %v1242, 0.0
        %v1307 = vmax.f32 %v1243, 0.0
        %v1308 = vmax.f32 %v1244, 0.0
        %v1309 = vmax.f32 %v1245, 0.0
        %v1310 = vmax.f32 %v1246, 0.0
        %v1311 = vmax.f32 %v1247, 0.0
        %v1312 = vmax.f32 %v1248, 0.0
        %v1313 = vmax.f32 %v1249, 0.0
        %v1314 = vmax.f32 %v1250, 0.0
        %v1315 = vmax.f32 %v1251, 0.0
        %v1316 = vmax.f32 %v1252, 0.0
        %v1317 = vmax.f32 %v1253, 0.0
        %v1318 = vmax.f32 %v1254, 0.0
        %v1319 = vmax.f32 %v1255, 0.0
        %v1320 = vmax.f32 %v1256, 0.0
        %v1321 = vmax.f32 %v1257, 0.0
        %v1322 = vmax.f32 %v1258, 0.0
        %v1323 = vmax.f32 %v1259, 0.0
        %v1324 = vmax.f32 %v1260, 0.0
        %v1325 = vmax.f32 %v1261, 0.0
        %v1326 = vmax.f32 %v1262, 0.0
        %v1327 = vmax.f32 %v1263, 0.0
        %v1328 = vmax.f32 %v1264, 0.0
        %v1329 = vmax.f32 %v1265, 0.0
        %v1330 = vmax.f32 %v1266, 0.0
        %v1331 = vmax.f32 %v1267, 0.0
        %v1332 = vmax.f32 %v1268, 0.0
        %v1333 = vmax.f32 %v1269, 0.0
        %v1334 = vmax.f32 %v1270, 0.0
        %v1335 = vmax.f32 %v1271, 0.0
        %v1336 = vmax.f32 %v1272, 0.0
        %v1337 = vmax.f32 %v1273, 0.0
        %v1338 = vmax.f32 %v1274, 0.0
        %v1339 = vmax.f32 %v1275, 0.0
        %v1340 = vmax.f32 %v1276, 0.0
        %v1341 = vmax.f32 %v1277, 0.0
        %v1342 = vmax.f32 %v1278, 0.0
        %v1343 = vmax.f32 %v1279, 0.0
        %v1344 = vmax.f32 %v1280, 0.0
        %v1345 = vmax.f32 %v1281, 0.0
        %v1346 = vmax.f32 %v1282, 0.0
        %v1347 = vmax.f32 %v1283, 0.0
        %v1348 = vmax.f32 %v1284, 0.0
        %v1349 = vmax.f32 %v1285, 0.0
        %v1350 = vmax.f32 %v1286, 0.0
        %v1351 = vmax.f32 %v1287, 0.0
        %v1352 = vmax.f32 %v1288, 0.0
        %v1353 = vmax.f32 %v1289, 0.0
        %v1354 = vmax.f32 %v1290, 0.0
        %v1355 = vmax.f32 %v1291, 0.0
        %v1356 = vpack.c.bf16 %v1293, %v1292
        %v1357 = vpack.c.bf16 %v1295, %v1294
        %v1358 = vpack.c.bf16 %v1297, %v1296
        %v1359 = vpack.c.bf16 %v1299, %v1298
        %v1360 = vpack.c.bf16 %v1301, %v1300
        %v1361 = vpack.c.bf16 %v1303, %v1302
        %v1362 = vpack.c.bf16 %v1305, %v1304
        %v1363 = vpack.c.bf16 %v1307, %v1306
        %v1364 = vpack.c.bf16 %v1309, %v1308
        %v1365 = vpack.c.bf16 %v1311, %v1310
        %v1366 = vpack.c.bf16 %v1313, %v1312
        %v1367 = vpack.c.bf16 %v1315, %v1314
        %v1368 = vpack.c.bf16 %v1317, %v1316
        %v1369 = vpack.c.bf16 %v1319, %v1318
        %v1370 = vpack.c.bf16 %v1321, %v1320
        %v1371 = vpack.c.bf16 %v1323, %v1322
        %v1372 = vpack.c.bf16 %v1325, %v1324
        %v1373 = vpack.c.bf16 %v1327, %v1326
        %v1374 = vpack.c.bf16 %v1329, %v1328
        %v1375 = vpack.c.bf16 %v1331, %v1330
        %v1376 = vpack.c.bf16 %v1333, %v1332
        %v1377 = vpack.c.bf16 %v1335, %v1334
        %v1378 = vpack.c.bf16 %v1337, %v1336
        %v1379 = vpack.c.bf16 %v1339, %v1338
        %v1380 = vpack.c.bf16 %v1341, %v1340
        %v1381 = vpack.c.bf16 %v1343, %v1342
        %v1382 = vpack.c.bf16 %v1345, %v1344
        %v1383 = vpack.c.bf16 %v1347, %v1346
        %v1384 = vpack.c.bf16 %v1349, %v1348
        %v1385 = vpack.c.bf16 %v1351, %v1350
        %v1386 = vpack.c.bf16 %v1353, %v1352
        %v1387 = vpack.c.bf16 %v1355, %v1354
        %v1420 = vunpack.c.l.b16 %v1356
        %v1421 = vunpack.c.h.b16 %v1356
        %v1422 = vunpack.c.l.b16 %v1357
        %v1423 = vunpack.c.h.b16 %v1357
        %v1424 = vunpack.c.l.b16 %v1358
        %v1425 = vunpack.c.h.b16 %v1358
        %v1426 = vunpack.c.l.b16 %v1359
        %v1427 = vunpack.c.h.b16 %v1359
        %v1428 = vunpack.c.l.b16 %v1360
        %v1429 = vunpack.c.h.b16 %v1360
        %v1430 = vunpack.c.l.b16 %v1361
        %v1431 = vunpack.c.h.b16 %v1361
        %v1432 = vunpack.c.l.b16 %v1362
        %v1433 = vunpack.c.h.b16 %v1362
        %v1434 = vunpack.c.l.b16 %v1363
        %v1435 = vunpack.c.h.b16 %v1363
        %v1436 = vunpack.c.l.b16 %v1364
        %v1437 = vunpack.c.h.b16 %v1364
        %v1438 = vunpack.c.l.b16 %v1365
        %v1439 = vunpack.c.h.b16 %v1365
        %v1440 = vunpack.c.l.b16 %v1366
        %v1441 = vunpack.c.h.b16 %v1366
        %v1442 = vunpack.c.l.b16 %v1367
        %v1443 = vunpack.c.h.b16 %v1367
        %v1444 = vunpack.c.l.b16 %v1368
        %v1445 = vunpack.c.h.b16 %v1368
        %v1446 = vunpack.c.l.b16 %v1369
        %v1447 = vunpack.c.h.b16 %v1369
        %v1448 = vunpack.c.l.b16 %v1370
        %v1449 = vunpack.c.h.b16 %v1370
        %v1450 = vunpack.c.l.b16 %v1371
        %v1451 = vunpack.c.h.b16 %v1371
        %v1452 = vunpack.c.l.b16 %v1372
        %v1453 = vunpack.c.h.b16 %v1372
        %v1454 = vunpack.c.l.b16 %v1373
        %v1455 = vunpack.c.h.b16 %v1373
        %v1456 = vunpack.c.l.b16 %v1374
        %v1457 = vunpack.c.h.b16 %v1374
        %v1458 = vunpack.c.l.b16 %v1375
        %v1459 = vunpack.c.h.b16 %v1375
        %v1460 = vunpack.c.l.b16 %v1376
        %v1461 = vunpack.c.h.b16 %v1376
        %v1462 = vunpack.c.l.b16 %v1377
        %v1463 = vunpack.c.h.b16 %v1377
        %v1464 = vunpack.c.l.b16 %v1378
        %v1465 = vunpack.c.h.b16 %v1378
        %v1466 = vunpack.c.l.b16 %v1379
        %v1467 = vunpack.c.h.b16 %v1379
        %v1468 = vunpack.c.l.b16 %v1380
        %v1469 = vunpack.c.h.b16 %v1380
        %v1470 = vunpack.c.l.b16 %v1381
        %v1471 = vunpack.c.h.b16 %v1381
        %v1472 = vunpack.c.l.b16 %v1382
        %v1473 = vunpack.c.h.b16 %v1382
        %v1474 = vunpack.c.l.b16 %v1383
        %v1475 = vunpack.c.h.b16 %v1383
        %v1476 = vunpack.c.l.b16 %v1384
        %v1477 = vunpack.c.h.b16 %v1384
        %v1478 = vunpack.c.l.b16 %v1385
        %v1479 = vunpack.c.h.b16 %v1385
        %v1480 = vunpack.c.l.b16 %v1386
        %v1481 = vunpack.c.h.b16 %v1386
        %v1482 = vunpack.c.l.b16 %v1387
        %v1483 = vunpack.c.h.b16 %v1387
        %v1484 = vpack.c.b16 %v1420, %v1420
        %v1485 = vpack.c.b16 %v1421, %v1421
        %v1486 = vpack.c.b16 %v1422, %v1422
        %v1487 = vpack.c.b16 %v1423, %v1423
        %v1488 = vpack.c.b16 %v1424, %v1424
        %v1489 = vpack.c.b16 %v1425, %v1425
        %v1490 = vpack.c.b16 %v1426, %v1426
        %v1491 = vpack.c.b16 %v1427, %v1427
        %v1492 = vpack.c.b16 %v1428, %v1428
        %v1493 = vpack.c.b16 %v1429, %v1429
        %v1494 = vpack.c.b16 %v1430, %v1430
        %v1495 = vpack.c.b16 %v1431, %v1431
        %v1496 = vpack.c.b16 %v1432, %v1432
        %v1497 = vpack.c.b16 %v1433, %v1433
        %v1498 = vpack.c.b16 %v1434, %v1434
        %v1499 = vpack.c.b16 %v1435, %v1435
        %v1500 = vpack.c.b16 %v1436, %v1436
        %v1501 = vpack.c.b16 %v1437, %v1437
        %v1502 = vpack.c.b16 %v1438, %v1438
        %v1503 = vpack.c.b16 %v1439, %v1439
        %v1504 = vpack.c.b16 %v1440, %v1440
        %v1505 = vpack.c.b16 %v1441, %v1441
        %v1506 = vpack.c.b16 %v1442, %v1442
        %v1507 = vpack.c.b16 %v1443, %v1443
        %v1508 = vpack.c.b16 %v1444, %v1444
        %v1509 = vpack.c.b16 %v1445, %v1445
        %v1510 = vpack.c.b16 %v1446, %v1446
        %v1511 = vpack.c.b16 %v1447, %v1447
        %v1512 = vpack.c.b16 %v1448, %v1448
        %v1513 = vpack.c.b16 %v1449, %v1449
        %v1514 = vpack.c.b16 %v1450, %v1450
        %v1515 = vpack.c.b16 %v1451, %v1451
        %v1516 = vpack.c.b16 %v1452, %v1452
        %v1517 = vpack.c.b16 %v1453, %v1453
        %v1518 = vpack.c.b16 %v1454, %v1454
        %v1519 = vpack.c.b16 %v1455, %v1455
        %v1520 = vpack.c.b16 %v1456, %v1456
        %v1521 = vpack.c.b16 %v1457, %v1457
        %v1522 = vpack.c.b16 %v1458, %v1458
        %v1523 = vpack.c.b16 %v1459, %v1459
        %v1524 = vpack.c.b16 %v1460, %v1460
        %v1525 = vpack.c.b16 %v1461, %v1461
        %v1526 = vpack.c.b16 %v1462, %v1462
        %v1527 = vpack.c.b16 %v1463, %v1463
        %v1528 = vpack.c.b16 %v1464, %v1464
        %v1529 = vpack.c.b16 %v1465, %v1465
        %v1530 = vpack.c.b16 %v1466, %v1466
        %v1531 = vpack.c.b16 %v1467, %v1467
        %v1532 = vpack.c.b16 %v1468, %v1468
        %v1533 = vpack.c.b16 %v1469, %v1469
        %v1534 = vpack.c.b16 %v1470, %v1470
        %v1535 = vpack.c.b16 %v1471, %v1471
        %v1536 = vpack.c.b16 %v1472, %v1472
        %v1537 = vpack.c.b16 %v1473, %v1473
        %v1538 = vpack.c.b16 %v1474, %v1474
        %v1539 = vpack.c.b16 %v1475, %v1475
        %v1540 = vpack.c.b16 %v1476, %v1476
        %v1541 = vpack.c.b16 %v1477, %v1477
        %v1542 = vpack.c.b16 %v1478, %v1478
        %v1543 = vpack.c.b16 %v1479, %v1479
        %v1544 = vpack.c.b16 %v1480, %v1480
        %v1545 = vpack.c.b16 %v1481, %v1481
        %v1546 = vpack.c.b16 %v1482, %v1482
        %v1547 = vpack.c.b16 %v1483, %v1483
        %vm1612 = vcmask 519168
        %1613 = vst.msk [vmem:[%s257] sm:$0xf] %vm1612, %v1484
        %1614 = vst.msk [vmem:[%s257 + $0x4] sm:$0xf] %vm1612, %v1485
        %1615 = vst.msk [vmem:[%s257 + $0x8] sm:$0xf] %vm1612, %v1486
        %1616 = vst.msk [vmem:[%s257 + $0xc] sm:$0xf] %vm1612, %v1487
        %1617 = vst.msk [vmem:[%s257 + $0x10] sm:$0xf] %vm1612, %v1488
        %1618 = vst.msk [vmem:[%s257 + $0x14] sm:$0xf] %vm1612, %v1489
        %1619 = vst.msk [vmem:[%s257 + $0x18] sm:$0xf] %vm1612, %v1490
        %1620 = vst.msk [vmem:[%s257 + $0x1c] sm:$0xf] %vm1612, %v1491
        %1621 = vst.msk [vmem:[%s257 + $0x20] sm:$0xf] %vm1612, %v1492
        %1622 = vst.msk [vmem:[%s257 + $0x24] sm:$0xf] %vm1612, %v1493
        %1623 = vst.msk [vmem:[%s257 + $0x28] sm:$0xf] %vm1612, %v1494
        %1624 = vst.msk [vmem:[%s257 + $0x2c] sm:$0xf] %vm1612, %v1495
        %1625 = vst.msk [vmem:[%s257 + $0x30] sm:$0xf] %vm1612, %v1496
        %1626 = vst.msk [vmem:[%s257 + $0x34] sm:$0xf] %vm1612, %v1497
        %1627 = vst.msk [vmem:[%s257 + $0x38] sm:$0xf] %vm1612, %v1498
        %1628 = vst.msk [vmem:[%s257 + $0x3c] sm:$0xf] %vm1612, %v1499
        %1629 = vst.msk [vmem:[%s257 + $0x40] sm:$0xf] %vm1612, %v1500
        %1630 = vst.msk [vmem:[%s257 + $0x44] sm:$0xf] %vm1612, %v1501
        %1631 = vst.msk [vmem:[%s257 + $0x48] sm:$0xf] %vm1612, %v1502
        %1632 = vst.msk [vmem:[%s257 + $0x4c] sm:$0xf] %vm1612, %v1503
        %1633 = vst.msk [vmem:[%s257 + $0x50] sm:$0xf] %vm1612, %v1504
        %1634 = vst.msk [vmem:[%s257 + $0x54] sm:$0xf] %vm1612, %v1505
        %1635 = vst.msk [vmem:[%s257 + $0x58] sm:$0xf] %vm1612, %v1506
        %1636 = vst.msk [vmem:[%s257 + $0x5c] sm:$0xf] %vm1612, %v1507
        %1637 = vst.msk [vmem:[%s257 + $0x60] sm:$0xf] %vm1612, %v1508
        %1638 = vst.msk [vmem:[%s257 + $0x64] sm:$0xf] %vm1612, %v1509
        %1639 = vst.msk [vmem:[%s257 + $0x68] sm:$0xf] %vm1612, %v1510
        %1640 = vst.msk [vmem:[%s257 + $0x6c] sm:$0xf] %vm1612, %v1511
        %1641 = vst.msk [vmem:[%s257 + $0x70] sm:$0xf] %vm1612, %v1512
        %1642 = vst.msk [vmem:[%s257 + $0x74] sm:$0xf] %vm1612, %v1513
        %1643 = vst.msk [vmem:[%s257 + $0x78] sm:$0xf] %vm1612, %v1514
        %1644 = vst.msk [vmem:[%s257 + $0x7c] sm:$0xf] %vm1612, %v1515
        %1645 = vst.msk [vmem:[%s257 + $0x80] sm:$0xf] %vm1612, %v1516
        %1646 = vst.msk [vmem:[%s257 + $0x84] sm:$0xf] %vm1612, %v1517
        %1647 = vst.msk [vmem:[%s257 + $0x88] sm:$0xf] %vm1612, %v1518
        %1648 = vst.msk [vmem:[%s257 + $0x8c] sm:$0xf] %vm1612, %v1519
        %1649 = vst.msk [vmem:[%s257 + $0x90] sm:$0xf] %vm1612, %v1520
        %1650 = vst.msk [vmem:[%s257 + $0x94] sm:$0xf] %vm1612, %v1521
        %1651 = vst.msk [vmem:[%s257 + $0x98] sm:$0xf] %vm1612, %v1522
        %1652 = vst.msk [vmem:[%s257 + $0x9c] sm:$0xf] %vm1612, %v1523
        %1653 = vst.msk [vmem:[%s257 + $0xa0] sm:$0xf] %vm1612, %v1524
        %1654 = vst.msk [vmem:[%s257 + $0xa4] sm:$0xf] %vm1612, %v1525
        %1655 = vst.msk [vmem:[%s257 + $0xa8] sm:$0xf] %vm1612, %v1526
        %1656 = vst.msk [vmem:[%s257 + $0xac] sm:$0xf] %vm1612, %v1527
        %1657 = vst.msk [vmem:[%s257 + $0xb0] sm:$0xf] %vm1612, %v1528
        %1658 = vst.msk [vmem:[%s257 + $0xb4] sm:$0xf] %vm1612, %v1529
        %1659 = vst.msk [vmem:[%s257 + $0xb8] sm:$0xf] %vm1612, %v1530
        %1660 = vst.msk [vmem:[%s257 + $0xbc] sm:$0xf] %vm1612, %v1531
        %1661 = vst.msk [vmem:[%s257 + $0xc0] sm:$0xf] %vm1612, %v1532
        %1662 = vst.msk [vmem:[%s257 + $0xc4] sm:$0xf] %vm1612, %v1533
        %1663 = vst.msk [vmem:[%s257 + $0xc8] sm:$0xf] %vm1612, %v1534
        %1664 = vst.msk [vmem:[%s257 + $0xcc] sm:$0xf] %vm1612, %v1535
        %1665 = vst.msk [vmem:[%s257 + $0xd0] sm:$0xf] %vm1612, %v1536
        %1666 = vst.msk [vmem:[%s257 + $0xd4] sm:$0xf] %vm1612, %v1537
        %1667 = vst.msk [vmem:[%s257 + $0xd8] sm:$0xf] %vm1612, %v1538
        %1668 = vst.msk [vmem:[%s257 + $0xdc] sm:$0xf] %vm1612, %v1539
        %1669 = vst.msk [vmem:[%s257 + $0xe0] sm:$0xf] %vm1612, %v1540
        %1670 = vst.msk [vmem:[%s257 + $0xe4] sm:$0xf] %vm1612, %v1541
        %1671 = vst.msk [vmem:[%s257 + $0xe8] sm:$0xf] %vm1612, %v1542
        %1672 = vst.msk [vmem:[%s257 + $0xec] sm:$0xf] %vm1612, %v1543
        %1673 = vst.msk [vmem:[%s257 + $0xf0] sm:$0xf] %vm1612, %v1544
        %1674 = vst.msk [vmem:[%s257 + $0xf4] sm:$0xf] %vm1612, %v1545
        %1675 = vst.msk [vmem:[%s257 + $0xf8] sm:$0xf] %vm1612, %v1546
        %1676 = vst.msk [vmem:[%s257 + $0xfc] sm:$0xf] %vm1612, %v1547
      $region40: #{tpu_custom_call.1} parent=31 // pred_fallthru
        _
      %s1677 = smul.u32 64, %s19
      %p1678 = scmp.lt.s32.totalorder %s1677, 255
      %s1679 = scalar_select %p1678, %s1677, 255
      %p1680 = scmp.lt.s32.totalorder %s20, 0
      %s1681 = scalar_select %p1680, %s20, 0
      %s1682 = sadd.s32 %s1681, %s1679
      %s1683 = smul.addr %s1682, 4
      %s1684 = scalar_lea.vmem %s3, %s1683
      // Predicated region
      $region41: #{tpu_custom_call.1} parent=31 // pred_check
        %p1685 = pneg %p135
      $region42: #{tpu_custom_call.1} parent=31 // pred_check_branch
        %1687 = sbr.rel (%p1685) target = $region44
      $region43: #{tpu_custom_call.1} parent=31 // pred_region
        %s1688 = smul.u32 64, %s19
      $region44: #{tpu_custom_call.1} parent=31 // pred_fallthru
        _
    $region32: #{tpu_custom_call.1} parent=5 // pred_fallthru
      _
    %p1689 = scmp.le.s32.totalorder 2, %s9
    // Predicated region
    $region45: #{tpu_custom_call.1} parent=5 // pred_check
      %p1690 = pneg %p1689
    $region46: #{tpu_custom_call.1} parent=5 // pred_check_branch
      %1692 = sbr.rel (%p1690) target = $region48
    $region47: #{tpu_custom_call.1} parent=5 // pred_region
      %s1693 = ssub.s32 %s9, 2
      // Predicated region
      $region49: #{tpu_custom_call.1} parent=47 // pred_check
        %p1694 = pneg %p141
      $region50: #{tpu_custom_call.1} parent=47 // pred_check_branch
        %1696 = sbr.rel (%p1694) target = $region52
      $region51: #{tpu_custom_call.1} parent=47 // pred_region
        %s1697 = smul.u32 64, %s22
        %p1698 = scmp.lt.s32.totalorder %s1697, 255
        %s1699 = scalar_select %p1698, %s1697, 255
        %p1700 = scmp.lt.s32.totalorder %s23, 0
        %s1701 = scalar_select %p1700, %s23, 0
        %s1702 = sadd.s32 %s1701, %s1699
        %s1703 = smul.addr %s1702, 4
        %s1704 = scalar_lea.vmem %s3, %s1703
      $region52: #{tpu_custom_call.1} parent=47 // pred_fallthru
        _
    $region48: #{tpu_custom_call.1} parent=5 // pred_fallthru
      _
  $region6: #{tpu_custom_call.1} parent=0 // loop_footer
    %s13 = sadd.s32 1, %s9
  $region7: #{tpu_custom_call.1} parent=0 // loop_footer_branch
    %8 = sbr.rel target = $region3
  $region8: #{tpu_custom_call.1} parent=0 // loop_exit
    _

</llo_original>
